<compile_context>
chip_gen: v7x
topology: tpu7x:2x2x1
jax: 0.10.0
libtpu: 0.0.40
codegen_flags: <defaults>
</compile_context>

<pallas_src>
import functools
import math

import jax
import jax.numpy as jnp
from jax import lax
from jax.experimental import pallas as pl
from jax.experimental.pallas import tpu as pltpu


def _bunn_kernel(adj_ref, x_ref, rep_ref, w1x_ref, w1h_ref, b1_ref, w2_ref, b2_ref,
                 out_ref, bt_ref, *, num_bundles, bundle_dim, f, max_degree, tau):
    f32 = jnp.float32
    n, dim = x_ref.shape
    B, d = num_bundles, bundle_dim

    adj = adj_ref[...]                     # [N, N] bf16, symmetric 0/1 (+ self loops)
    x = x_ref[...]                         # [N, dim] f32 (lane-padded feature layout)
    rep = rep_ref[...]                     # [N, B*d*d] f32, compact node_rep

    # ---- degrees: XLU lane reduction (exact f32 accumulation), guarded rsqrt ----
    # A degree-0 node yields 0 instead of inf/NaN (matches DGL: no in-edges -> 0 agg).
    deg = jnp.sum(adj, axis=1, keepdims=True, dtype=f32)            # [N, 1]
    inv_sqrt = jnp.where(deg > 0.0, lax.rsqrt(jnp.maximum(deg, 1.0)),
                         jnp.zeros_like(deg))
    inv_sqrt_b = jnp.broadcast_to(inv_sqrt, (n, dim))               # hoisted once

    # ---- bundle transforms on compact rep (VPU slices; no MXU / P matmuls) ----
    def bundle_transform(v, dst_ref, transpose):
        for b in range(B):
            for c in range(d):
                acc = jnp.zeros((n, f), dtype=f32)
                for dd in range(d):
                    ridx = (b * d + dd) * d + c if transpose else (b * d + c) * d + dd
                    r = rep[:, ridx:ridx + 1]                       # [N, 1] coefficient
                    acc = acc + r * v[:, (b * d + dd) * f:(b * d + dd + 1) * f]
                dst_ref[:, (b * d + c) * f:(b * d + c + 1) * f] = acc

    bundle_transform(x, bt_ref, transpose=False)                    # forward: node_rep
    h0 = bt_ref[...]

    # ---- truncated heat-kernel diffusion, normalization folded in ----
    # agg = D^{-1/2} A D^{-1/2} curr  (== a_norm.T @ curr since A is symmetric)
    h = h0
    curr = h0
    for k in range(1, max_degree + 1):
        scaled = (inv_sqrt_b * curr).astype(adj.dtype)              # bf16 MXU RHS
        agg = jnp.dot(adj, scaled, preferred_element_type=f32)      # f32 accumulation
        curr = (-tau / float(k)) * (curr - inv_sqrt_b * agg)
        h = h + curr

    # ---- FeedForwardModule on cat([x, h]) (concat never materialized) ----
    # bf16 operands, f32 accumulation; dropout = identity (eval mode).
    z = (jnp.dot(x.astype(jnp.bfloat16), w1x_ref[...], preferred_element_type=f32)
         + jnp.dot(h.astype(jnp.bfloat16), w1h_ref[...], preferred_element_type=f32)
         + b1_ref[...])
    z = 0.5 * z * (1.0 + lax.erf(z * (1.0 / math.sqrt(2.0))))       # exact GELU
    y = (jnp.dot(z.astype(jnp.bfloat16), w2_ref[...], preferred_element_type=f32)
         + b2_ref[...])

    # ---- inverse bundle transform (node_rep transposed), assembled into out ----
    bundle_transform(y, out_ref, transpose=True)


def _pad_axis(a, axis, size):
    if a.shape[axis] == size:
        return a
    pads = [(0, 0)] * a.ndim
    pads[axis] = (0, size - a.shape[axis])
    return jnp.pad(a, pads)


def _vmem_limit_bytes():
    cap = 64 * 1024 * 1024                      # conservative default (v7x-sized)
    try:
        cap = int(pltpu.get_tpu_info().vmem_capacity_bytes)
    except Exception:
        pass
    # leave ~25% headroom for Mosaic internal scratch / pipelining buffers
    return max(16 * 1024 * 1024, min((cap * 3) // 4, 112 * 1024 * 1024))


def bunn_forward(adj, x, node_rep, w1, b1, w2, b2, *, max_degree, tau):
    n, dim = x.shape
    B, d = node_rep.shape[1], node_rep.shape[2]
    assert node_rep.shape == (n, B, d, d)
    assert dim % (B * d) == 0, "dim must be divisible by num_bundles*bundle_dim"
    f = dim // (B * d)
    hidden = w1.shape[1]
    assert w1.shape == (2 * dim, hidden)
    # NOTE: kernel assumes a symmetric 0/1 adjacency (as built by the undirected
    # heterophilous-graph pipeline); degree-0 nodes are handled via a guarded rsqrt.

    # Lane-dense padding: pad the per-bundle-row width f so dim_pad = B*d*f_pad is a
    # multiple of 128 (unmasked vst, full MXU columns), hidden to a multiple of 128.
    g = math.gcd(B * d, 128)
    step = 128 // g
    f_pad = ((f + step - 1) // step) * step
    dim_pad = B * d * f_pad
    hidden_pad = ((hidden + 127) // 128) * 128

    f32, bf16 = jnp.float32, jnp.bfloat16

    x_p = _pad_axis(x.astype(f32).reshape(n, B, d, f), 3, f_pad).reshape(n, dim_pad)
    rep2 = node_rep.astype(f32).reshape(n, B * d * d)        # compact (a few KiB)

    # Split + pad FFN weights wrapper-side (zero rows/cols at padded positions).
    w1x = _pad_axis(_pad_axis(w1[:dim].astype(f32).reshape(B, d, f, hidden), 2, f_pad),
                    3, hidden_pad).reshape(dim_pad, hidden_pad).astype(bf16)
    w1h = _pad_axis(_pad_axis(w1[dim:].astype(f32).reshape(B, d, f, hidden), 2, f_pad),
                    3, hidden_pad).reshape(dim_pad, hidden_pad).astype(bf16)
    b1_p = _pad_axis(b1.astype(f32).reshape(1, hidden), 1, hidden_pad)
    w2_p = _pad_axis(
        _pad_axis(w2.astype(f32).reshape(hidden, B, d, f), 3, f_pad).reshape(hidden, dim_pad),
        0, hidden_pad).astype(bf16)
    b2_p = _pad_axis(b2.astype(f32).reshape(1, B, d, f), 3, f_pad).reshape(1, dim_pad)

    adj_bf16 = adj.astype(bf16)                               # 0/1 exact in bf16

    kernel = functools.partial(_bunn_kernel, num_bundles=B, bundle_dim=d, f=f_pad,
                               max_degree=max_degree, tau=tau)

    def full_spec(shape):
        nd = len(shape)
        return pl.BlockSpec(shape, lambda *_: (0,) * nd)

    flops = (2 * max_degree * n * n * dim_pad            # diffusion matmuls (dominant)
             + 4 * n * dim_pad * hidden_pad              # FFN layer 1 (two dots)
             + 2 * n * hidden_pad * dim_pad              # FFN layer 2
             + 4 * d * n * dim_pad                       # bundle transforms (VPU FMAs)
             + n * n)                                    # degree reduction
    bytes_accessed = (n * n * 2                          # adj (bf16)
                      + 2 * n * dim_pad * 4              # x + out
                      + n * B * d * d * 4                # compact node_rep
                      + 3 * dim_pad * hidden_pad * 2     # w1x + w1h + w2 (bf16)
                      + (hidden_pad + dim_pad) * 4)      # biases
    cost = pl.CostEstimate(flops=int(flops),
                           transcendentals=int(n * hidden_pad + n),
                           bytes_accessed=int(bytes_accessed))

    out_p = pl.pallas_call(
        kernel,
        grid=(1,),   # everything VMEM-resident at these sizes -> single program
        in_specs=[full_spec(adj_bf16.shape), full_spec(x_p.shape), full_spec(rep2.shape),
                  full_spec(w1x.shape), full_spec(w1h.shape), full_spec(b1_p.shape),
                  full_spec(w2_p.shape), full_spec(b2_p.shape)],
        out_specs=full_spec((n, dim_pad)),
        out_shape=jax.ShapeDtypeStruct((n, dim_pad), f32),
        scratch_shapes=[pltpu.VMEM((n, dim_pad), f32)],   # bundle-transform staging
        compiler_params=pltpu.CompilerParams(
            dimension_semantics=("arbitrary",),
            vmem_limit_bytes=_vmem_limit_bytes()),
        cost_estimate=cost,
    )(adj_bf16, x_p, rep2, w1x, w1h, b1_p, w2_p, b2_p)

    return out_p.reshape(n, B, d, f_pad)[:, :, :, :f].reshape(n, dim)


def _bunn_reference(adj, x, node_rep, w1, b1, w2, b2, *, max_degree, tau):
    """Pure-JAX f32 reference mirroring the PyTorch/DGL forward (eval mode)."""
    n, dim = x.shape
    num_bundles, bundle_dim = node_rep.shape[1], node_rep.shape[2]
    f = dim // (num_bundles * bundle_dim)

    deg = adj.sum(axis=1)                                    # out_degrees
    a_norm = adj / jnp.sqrt(deg[:, None] * deg[None, :])     # per-edge norm coefs

    vf = x.reshape(n, num_bundles, bundle_dim, f)
    vf = jnp.einsum('abcd,abde->abce', node_rep, vf)
    h = vf.reshape(n, dim)
    curr = h
    for k in range(1, max_degree + 1):
        agg = a_norm.T @ curr                                # u_mul_e_sum over in-edges
        curr = (-tau / float(k)) * (curr - agg)
        h = h + curr
    h = jnp.concatenate([x, h], axis=1)
    h = h @ w1 + b1
    h = 0.5 * h * (1.0 + lax.erf(h / math.sqrt(2.0)))
    h = h @ w2 + b2
    vf = h.reshape(n, num_bundles, bundle_dim, f)
    vf = jnp.einsum('abcd,abde->abce', jnp.swapaxes(node_rep, 2, 3), vf)
    return vf.reshape(n, dim)


if __name__ == "__main__":
    key = jax.random.PRNGKey(0)

    # Small shapes consistent with the module: dim = num_bundles * bundle_dim * f
    N, DIM = 64, 32
    NUM_BUNDLES, BUNDLE_DIM = 2, 2
    HIDDEN_DIM_MULTIPLIER = 2
    MAX_DEGREE, TAU = 4, 0.1
    HIDDEN = DIM * HIDDEN_DIM_MULTIPLIER         # FeedForwardModule hidden dim
    FF_IN = 2 * DIM                              # input_dim_multiplier = 2 (cat([x, h]))

    k_adj, k_x, k_rep, k_w1, k_w2 = jax.random.split(key, 5)

    # Deterministic random undirected graph with self-loops (every degree > 0).
    rnd = jax.random.uniform(k_adj, (N, N))
    adj = (rnd < 0.1).astype(jnp.float32)
    adj = jnp.maximum(adj, adj.T)
    adj = jnp.maximum(adj, jnp.eye(N, dtype=jnp.float32))

    x = jax.random.normal(k_x, (N, DIM), dtype=jnp.float32)
    node_rep = 0.5 * jax.random.normal(
        k_rep, (N, NUM_BUNDLES, BUNDLE_DIM, BUNDLE_DIM), dtype=jnp.float32)

    # FeedForwardModule parameters (deterministic synthetic init; dropout = identity).
    w1 = jax.random.normal(k_w1, (FF_IN, HIDDEN), dtype=jnp.float32) / math.sqrt(FF_IN)
    b1 = jnp.zeros((HIDDEN,), dtype=jnp.float32)
    w2 = jax.random.normal(k_w2, (HIDDEN, DIM), dtype=jnp.float32) / math.sqrt(HIDDEN)
    b2 = jnp.zeros((DIM,), dtype=jnp.float32)

    out = bunn_forward(adj, x, node_rep, w1, b1, w2, b2, max_degree=MAX_DEGREE, tau=TAU)
    out = jax.block_until_ready(out)

    ref = _bunn_reference(adj, x, node_rep, w1, b1, w2, b2, max_degree=MAX_DEGREE, tau=TAU)
    assert out.shape == (N, DIM)
    assert jnp.allclose(out, ref, atol=2e-2, rtol=2e-2), float(jnp.max(jnp.abs(out - ref)))
    print("KERNEL_OK")
</pallas_src>

<mosaic_0001>
module attributes {stable_mosaic.version = 11 : i64} {
  func.func @_bunn_kernel(%arg0: i32, %arg1: memref<64x64xbf16, #tpu.memory_space<vmem>>, %arg2: memref<64x128xf32, #tpu.memory_space<vmem>>, %arg3: memref<64x8xf32, #tpu.memory_space<vmem>>, %arg4: memref<128x128xbf16, #tpu.memory_space<vmem>>, %arg5: memref<128x128xbf16, #tpu.memory_space<vmem>>, %arg6: memref<1x128xf32, #tpu.memory_space<vmem>>, %arg7: memref<128x128xbf16, #tpu.memory_space<vmem>>, %arg8: memref<1x128xf32, #tpu.memory_space<vmem>>, %arg9: memref<64x128xf32, #tpu.memory_space<vmem>>, %arg10: memref<64x128xf32, #tpu.memory_space<vmem>>) attributes {dimension_semantics = [#tpu.dimension_semantics<arbitrary>], iteration_bounds = array<i64: 1>, scalar_prefetch = 0 : i64, scratch_operands = 1 : i64, tpu.core_type = #tpu.core_type<tc>, window_params = [{pipeline_mode = #tpu.pipeline_mode<synchronous>, transform_indices = @transform_0, window_bounds = array<i64: 64, 64>}, {pipeline_mode = #tpu.pipeline_mode<synchronous>, transform_indices = @transform_1, window_bounds = array<i64: 64, 128>}, {pipeline_mode = #tpu.pipeline_mode<synchronous>, transform_indices = @transform_2, window_bounds = array<i64: 64, 8>}, {pipeline_mode = #tpu.pipeline_mode<synchronous>, transform_indices = @transform_3, window_bounds = array<i64: 128, 128>}, {pipeline_mode = #tpu.pipeline_mode<synchronous>, transform_indices = @transform_4, window_bounds = array<i64: 128, 128>}, {pipeline_mode = #tpu.pipeline_mode<synchronous>, transform_indices = @transform_5, window_bounds = array<i64: 1, 128>}, {pipeline_mode = #tpu.pipeline_mode<synchronous>, transform_indices = @transform_6, window_bounds = array<i64: 128, 128>}, {pipeline_mode = #tpu.pipeline_mode<synchronous>, transform_indices = @transform_7, window_bounds = array<i64: 1, 128>}, {pipeline_mode = #tpu.pipeline_mode<synchronous>, transform_indices = @transform_8, window_bounds = array<i64: 64, 128>}]} {
    %c0 = arith.constant 0 : index
    %c0_0 = arith.constant 0 : index
    %0 = vector.load %arg1[%c0, %c0_0] : memref<64x64xbf16, #tpu.memory_space<vmem>>, vector<64x64xbf16>
    %c0_1 = arith.constant 0 : index
    %c0_2 = arith.constant 0 : index
    %1 = vector.load %arg2[%c0_1, %c0_2] : memref<64x128xf32, #tpu.memory_space<vmem>>, vector<64x128xf32>
    %c0_3 = arith.constant 0 : index
    %c0_4 = arith.constant 0 : index
    %2 = vector.load %arg3[%c0_3, %c0_4] : memref<64x8xf32, #tpu.memory_space<vmem>>, vector<64x8xf32>
    %3 = arith.extf %0 : vector<64x64xbf16> to vector<64x64xf32>
    %cst = arith.constant dense<0.000000e+00> : vector<64xf32>
    %4 = vector.multi_reduction <add>, %3, %cst [1] : vector<64x64xf32> to vector<64xf32>
    %5 = vector.shape_cast %4 : vector<64xf32> to vector<64x1xf32>
    %cst_5 = arith.constant 0.000000e+00 : f32
    %6 = vector.broadcast %cst_5 : f32 to vector<64x1xf32>
    %7 = arith.cmpf ogt, %5, %6 : vector<64x1xf32>
    %cst_6 = arith.constant 1.000000e+00 : f32
    %8 = vector.broadcast %cst_6 : f32 to vector<64x1xf32>
    %9 = arith.maximumf %5, %8 : vector<64x1xf32>
    %10 = math.rsqrt %9 : vector<64x1xf32>
    %cst_7 = arith.constant 0.000000e+00 : f32
    %11 = vector.broadcast %cst_7 : f32 to vector<64x1xf32>
    %12 = arith.select %7, %10, %11 : vector<64x1xi1>, vector<64x1xf32>
    %13 = vector.shape_cast %12 : vector<64x1xf32> to vector<64x1xf32>
    %14 = vector.broadcast %13 : vector<64x1xf32> to vector<64x128xf32>
    %cst_8 = arith.constant 0.000000e+00 : f32
    %15 = vector.broadcast %cst_8 : f32 to vector<64x32xf32>
    %16 = vector.extract_strided_slice %2 {offsets = [0, 0], sizes = [64, 1], strides = [1, 1]} : vector<64x8xf32> to vector<64x1xf32>
    %17 = vector.extract_strided_slice %1 {offsets = [0, 0], sizes = [64, 32], strides = [1, 1]} : vector<64x128xf32> to vector<64x32xf32>
    %18 = vector.broadcast %16 : vector<64x1xf32> to vector<64x32xf32>
    %19 = arith.mulf %18, %17 : vector<64x32xf32>
    %20 = arith.addf %15, %19 : vector<64x32xf32>
    %21 = vector.extract_strided_slice %2 {offsets = [0, 1], sizes = [64, 1], strides = [1, 1]} : vector<64x8xf32> to vector<64x1xf32>
    %22 = vector.extract_strided_slice %1 {offsets = [0, 32], sizes = [64, 32], strides = [1, 1]} : vector<64x128xf32> to vector<64x32xf32>
    %23 = vector.broadcast %21 : vector<64x1xf32> to vector<64x32xf32>
    %24 = arith.mulf %23, %22 : vector<64x32xf32>
    %25 = arith.addf %20, %24 : vector<64x32xf32>
    %c0_9 = arith.constant 0 : index
    %c0_10 = arith.constant 0 : index
    %26 = vector.load %arg10[%c0_9, %c0_10] : memref<64x128xf32, #tpu.memory_space<vmem>>, vector<64x32xf32>
    tpu.vector_store %arg10[%c0_9, %c0_10], %25 {strides = array<i32>} : memref<64x128xf32, #tpu.memory_space<vmem>>, vector<64x32xf32>,
    %cst_11 = arith.constant 0.000000e+00 : f32
    %27 = vector.broadcast %cst_11 : f32 to vector<64x32xf32>
    %28 = vector.extract_strided_slice %2 {offsets = [0, 2], sizes = [64, 1], strides = [1, 1]} : vector<64x8xf32> to vector<64x1xf32>
    %29 = vector.extract_strided_slice %1 {offsets = [0, 0], sizes = [64, 32], strides = [1, 1]} : vector<64x128xf32> to vector<64x32xf32>
    %30 = vector.broadcast %28 : vector<64x1xf32> to vector<64x32xf32>
    %31 = arith.mulf %30, %29 : vector<64x32xf32>
    %32 = arith.addf %27, %31 : vector<64x32xf32>
    %33 = vector.extract_strided_slice %2 {offsets = [0, 3], sizes = [64, 1], strides = [1, 1]} : vector<64x8xf32> to vector<64x1xf32>
    %34 = vector.extract_strided_slice %1 {offsets = [0, 32], sizes = [64, 32], strides = [1, 1]} : vector<64x128xf32> to vector<64x32xf32>
    %35 = vector.broadcast %33 : vector<64x1xf32> to vector<64x32xf32>
    %36 = arith.mulf %35, %34 : vector<64x32xf32>
    %37 = arith.addf %32, %36 : vector<64x32xf32>
    %c0_12 = arith.constant 0 : index
    %c32 = arith.constant 32 : index
    %38 = vector.load %arg10[%c0_12, %c32] : memref<64x128xf32, #tpu.memory_space<vmem>>, vector<64x32xf32>
    tpu.vector_store %arg10[%c0_12, %c32], %37 {strides = array<i32>} : memref<64x128xf32, #tpu.memory_space<vmem>>, vector<64x32xf32>,
    %cst_13 = arith.constant 0.000000e+00 : f32
    %39 = vector.broadcast %cst_13 : f32 to vector<64x32xf32>
    %40 = vector.extract_strided_slice %2 {offsets = [0, 4], sizes = [64, 1], strides = [1, 1]} : vector<64x8xf32> to vector<64x1xf32>
    %41 = vector.extract_strided_slice %1 {offsets = [0, 64], sizes = [64, 32], strides = [1, 1]} : vector<64x128xf32> to vector<64x32xf32>
    %42 = vector.broadcast %40 : vector<64x1xf32> to vector<64x32xf32>
    %43 = arith.mulf %42, %41 : vector<64x32xf32>
    %44 = arith.addf %39, %43 : vector<64x32xf32>
    %45 = vector.extract_strided_slice %2 {offsets = [0, 5], sizes = [64, 1], strides = [1, 1]} : vector<64x8xf32> to vector<64x1xf32>
    %46 = vector.extract_strided_slice %1 {offsets = [0, 96], sizes = [64, 32], strides = [1, 1]} : vector<64x128xf32> to vector<64x32xf32>
    %47 = vector.broadcast %45 : vector<64x1xf32> to vector<64x32xf32>
    %48 = arith.mulf %47, %46 : vector<64x32xf32>
    %49 = arith.addf %44, %48 : vector<64x32xf32>
    %c0_14 = arith.constant 0 : index
    %c64 = arith.constant 64 : index
    %50 = vector.load %arg10[%c0_14, %c64] : memref<64x128xf32, #tpu.memory_space<vmem>>, vector<64x32xf32>
    tpu.vector_store %arg10[%c0_14, %c64], %49 {strides = array<i32>} : memref<64x128xf32, #tpu.memory_space<vmem>>, vector<64x32xf32>,
    %cst_15 = arith.constant 0.000000e+00 : f32
    %51 = vector.broadcast %cst_15 : f32 to vector<64x32xf32>
    %52 = vector.extract_strided_slice %2 {offsets = [0, 6], sizes = [64, 1], strides = [1, 1]} : vector<64x8xf32> to vector<64x1xf32>
    %53 = vector.extract_strided_slice %1 {offsets = [0, 64], sizes = [64, 32], strides = [1, 1]} : vector<64x128xf32> to vector<64x32xf32>
    %54 = vector.broadcast %52 : vector<64x1xf32> to vector<64x32xf32>
    %55 = arith.mulf %54, %53 : vector<64x32xf32>
    %56 = arith.addf %51, %55 : vector<64x32xf32>
    %57 = vector.extract_strided_slice %2 {offsets = [0, 7], sizes = [64, 1], strides = [1, 1]} : vector<64x8xf32> to vector<64x1xf32>
    %58 = vector.extract_strided_slice %1 {offsets = [0, 96], sizes = [64, 32], strides = [1, 1]} : vector<64x128xf32> to vector<64x32xf32>
    %59 = vector.broadcast %57 : vector<64x1xf32> to vector<64x32xf32>
    %60 = arith.mulf %59, %58 : vector<64x32xf32>
    %61 = arith.addf %56, %60 : vector<64x32xf32>
    %c0_16 = arith.constant 0 : index
    %c96 = arith.constant 96 : index
    %62 = vector.load %arg10[%c0_16, %c96] : memref<64x128xf32, #tpu.memory_space<vmem>>, vector<64x32xf32>
    tpu.vector_store %arg10[%c0_16, %c96], %61 {strides = array<i32>} : memref<64x128xf32, #tpu.memory_space<vmem>>, vector<64x32xf32>,
    %c0_17 = arith.constant 0 : index
    %c0_18 = arith.constant 0 : index
    %63 = vector.load %arg10[%c0_17, %c0_18] : memref<64x128xf32, #tpu.memory_space<vmem>>, vector<64x128xf32>
    %64 = arith.mulf %14, %63 : vector<64x128xf32>
    %65 = arith.truncf %64 : vector<64x128xf32> to vector<64x128xbf16>
    %cst_19 = arith.constant dense<0.000000e+00> : vector<64x128xf32>
    %66 = tpu.matmul %0, %65, %cst_19 {dimension_numbers = #tpu.dot_dimension_numbers<[1], [0], [0], [1], [0, 0, 1, 1], [], []>} : vector<64x64xbf16>, vector<64x128xbf16>, vector<64x128xf32> -> vector<64x128xf32>
    %67 = arith.mulf %14, %66 : vector<64x128xf32>
    %68 = arith.subf %63, %67 : vector<64x128xf32>
    %cst_20 = arith.constant -1.000000e-01 : f32
    %69 = vector.broadcast %cst_20 : f32 to vector<64x128xf32>
    %70 = arith.mulf %69, %68 : vector<64x128xf32>
    %71 = arith.addf %63, %70 : vector<64x128xf32>
    %72 = arith.mulf %14, %70 : vector<64x128xf32>
    %73 = arith.truncf %72 : vector<64x128xf32> to vector<64x128xbf16>
    %cst_21 = arith.constant dense<0.000000e+00> : vector<64x128xf32>
    %74 = tpu.matmul %0, %73, %cst_21 {dimension_numbers = #tpu.dot_dimension_numbers<[1], [0], [0], [1], [0, 0, 1, 1], [], []>} : vector<64x64xbf16>, vector<64x128xbf16>, vector<64x128xf32> -> vector<64x128xf32>
    %75 = arith.mulf %14, %74 : vector<64x128xf32>
    %76 = arith.subf %70, %75 : vector<64x128xf32>
    %cst_22 = arith.constant -5.000000e-02 : f32
    %77 = vector.broadcast %cst_22 : f32 to vector<64x128xf32>
    %78 = arith.mulf %77, %76 : vector<64x128xf32>
    %79 = arith.addf %71, %78 : vector<64x128xf32>
    %80 = arith.mulf %14, %78 : vector<64x128xf32>
    %81 = arith.truncf %80 : vector<64x128xf32> to vector<64x128xbf16>
    %cst_23 = arith.constant dense<0.000000e+00> : vector<64x128xf32>
    %82 = tpu.matmul %0, %81, %cst_23 {dimension_numbers = #tpu.dot_dimension_numbers<[1], [0], [0], [1], [0, 0, 1, 1], [], []>} : vector<64x64xbf16>, vector<64x128xbf16>, vector<64x128xf32> -> vector<64x128xf32>
    %83 = arith.mulf %14, %82 : vector<64x128xf32>
    %84 = arith.subf %78, %83 : vector<64x128xf32>
    %cst_24 = arith.constant -0.0333333351 : f32
    %85 = vector.broadcast %cst_24 : f32 to vector<64x128xf32>
    %86 = arith.mulf %85, %84 : vector<64x128xf32>
    %87 = arith.addf %79, %86 : vector<64x128xf32>
    %88 = arith.mulf %14, %86 : vector<64x128xf32>
    %89 = arith.truncf %88 : vector<64x128xf32> to vector<64x128xbf16>
    %cst_25 = arith.constant dense<0.000000e+00> : vector<64x128xf32>
    %90 = tpu.matmul %0, %89, %cst_25 {dimension_numbers = #tpu.dot_dimension_numbers<[1], [0], [0], [1], [0, 0, 1, 1], [], []>} : vector<64x64xbf16>, vector<64x128xbf16>, vector<64x128xf32> -> vector<64x128xf32>
    %91 = arith.mulf %14, %90 : vector<64x128xf32>
    %92 = arith.subf %86, %91 : vector<64x128xf32>
    %cst_26 = arith.constant -2.500000e-02 : f32
    %93 = vector.broadcast %cst_26 : f32 to vector<64x128xf32>
    %94 = arith.mulf %93, %92 : vector<64x128xf32>
    %95 = arith.addf %87, %94 : vector<64x128xf32>
    %96 = arith.truncf %1 : vector<64x128xf32> to vector<64x128xbf16>
    %c0_27 = arith.constant 0 : index
    %c0_28 = arith.constant 0 : index
    %97 = vector.load %arg4[%c0_27, %c0_28] : memref<128x128xbf16, #tpu.memory_space<vmem>>, vector<128x128xbf16>
    %cst_29 = arith.constant dense<0.000000e+00> : vector<64x128xf32>
    %98 = tpu.matmul %96, %97, %cst_29 {dimension_numbers = #tpu.dot_dimension_numbers<[1], [0], [0], [1], [0, 0, 1, 1], [], []>} : vector<64x128xbf16>, vector<128x128xbf16>, vector<64x128xf32> -> vector<64x128xf32>
    %99 = arith.truncf %95 : vector<64x128xf32> to vector<64x128xbf16>
    %c0_30 = arith.constant 0 : index
    %c0_31 = arith.constant 0 : index
    %100 = vector.load %arg5[%c0_30, %c0_31] : memref<128x128xbf16, #tpu.memory_space<vmem>>, vector<128x128xbf16>
    %cst_32 = arith.constant dense<0.000000e+00> : vector<64x128xf32>
    %101 = tpu.matmul %99, %100, %cst_32 {dimension_numbers = #tpu.dot_dimension_numbers<[1], [0], [0], [1], [0, 0, 1, 1], [], []>} : vector<64x128xbf16>, vector<128x128xbf16>, vector<64x128xf32> -> vector<64x128xf32>
    %102 = arith.addf %98, %101 : vector<64x128xf32>
    %c0_33 = arith.constant 0 : index
    %c0_34 = arith.constant 0 : index
    %103 = vector.load %arg6[%c0_33, %c0_34] : memref<1x128xf32, #tpu.memory_space<vmem>>, vector<1x128xf32>
    %104 = vector.broadcast %103 : vector<1x128xf32> to vector<64x128xf32>
    %105 = arith.addf %102, %104 : vector<64x128xf32>
    %cst_35 = arith.constant 5.000000e-01 : f32
    %106 = vector.broadcast %cst_35 : f32 to vector<64x128xf32>
    %107 = arith.mulf %106, %105 : vector<64x128xf32>
    %cst_36 = arith.constant 0.707106769 : f32
    %108 = vector.broadcast %cst_36 : f32 to vector<64x128xf32>
    %109 = arith.mulf %105, %108 : vector<64x128xf32>
    %110 = math.erf %109 : vector<64x128xf32>
    %cst_37 = arith.constant 1.000000e+00 : f32
    %111 = vector.broadcast %cst_37 : f32 to vector<64x128xf32>
    %112 = arith.addf %111, %110 : vector<64x128xf32>
    %113 = arith.mulf %107, %112 : vector<64x128xf32>
    %114 = arith.truncf %113 : vector<64x128xf32> to vector<64x128xbf16>
    %c0_38 = arith.constant 0 : index
    %c0_39 = arith.constant 0 : index
    %115 = vector.load %arg7[%c0_38, %c0_39] : memref<128x128xbf16, #tpu.memory_space<vmem>>, vector<128x128xbf16>
    %cst_40 = arith.constant dense<0.000000e+00> : vector<64x128xf32>
    %116 = tpu.matmul %114, %115, %cst_40 {dimension_numbers = #tpu.dot_dimension_numbers<[1], [0], [0], [1], [0, 0, 1, 1], [], []>} : vector<64x128xbf16>, vector<128x128xbf16>, vector<64x128xf32> -> vector<64x128xf32>
    %c0_41 = arith.constant 0 : index
    %c0_42 = arith.constant 0 : index
    %117 = vector.load %arg8[%c0_41, %c0_42] : memref<1x128xf32, #tpu.memory_space<vmem>>, vector<1x128xf32>
    %118 = vector.broadcast %117 : vector<1x128xf32> to vector<64x128xf32>
    %119 = arith.addf %116, %118 : vector<64x128xf32>
    %cst_43 = arith.constant 0.000000e+00 : f32
    %120 = vector.broadcast %cst_43 : f32 to vector<64x32xf32>
    %121 = vector.extract_strided_slice %2 {offsets = [0, 0], sizes = [64, 1], strides = [1, 1]} : vector<64x8xf32> to vector<64x1xf32>
    %122 = vector.extract_strided_slice %119 {offsets = [0, 0], sizes = [64, 32], strides = [1, 1]} : vector<64x128xf32> to vector<64x32xf32>
    %123 = vector.broadcast %121 : vector<64x1xf32> to vector<64x32xf32>
    %124 = arith.mulf %123, %122 : vector<64x32xf32>
    %125 = arith.addf %120, %124 : vector<64x32xf32>
    %126 = vector.extract_strided_slice %2 {offsets = [0, 2], sizes = [64, 1], strides = [1, 1]} : vector<64x8xf32> to vector<64x1xf32>
    %127 = vector.extract_strided_slice %119 {offsets = [0, 32], sizes = [64, 32], strides = [1, 1]} : vector<64x128xf32> to vector<64x32xf32>
    %128 = vector.broadcast %126 : vector<64x1xf32> to vector<64x32xf32>
    %129 = arith.mulf %128, %127 : vector<64x32xf32>
    %130 = arith.addf %125, %129 : vector<64x32xf32>
    %c0_44 = arith.constant 0 : index
    %c0_45 = arith.constant 0 : index
    %131 = vector.load %arg9[%c0_44, %c0_45] : memref<64x128xf32, #tpu.memory_space<vmem>>, vector<64x32xf32>
    tpu.vector_store %arg9[%c0_44, %c0_45], %130 {strides = array<i32>} : memref<64x128xf32, #tpu.memory_space<vmem>>, vector<64x32xf32>,
    %cst_46 = arith.constant 0.000000e+00 : f32
    %132 = vector.broadcast %cst_46 : f32 to vector<64x32xf32>
    %133 = vector.extract_strided_slice %2 {offsets = [0, 1], sizes = [64, 1], strides = [1, 1]} : vector<64x8xf32> to vector<64x1xf32>
    %134 = vector.extract_strided_slice %119 {offsets = [0, 0], sizes = [64, 32], strides = [1, 1]} : vector<64x128xf32> to vector<64x32xf32>
    %135 = vector.broadcast %133 : vector<64x1xf32> to vector<64x32xf32>
    %136 = arith.mulf %135, %134 : vector<64x32xf32>
    %137 = arith.addf %132, %136 : vector<64x32xf32>
    %138 = vector.extract_strided_slice %2 {offsets = [0, 3], sizes = [64, 1], strides = [1, 1]} : vector<64x8xf32> to vector<64x1xf32>
    %139 = vector.extract_strided_slice %119 {offsets = [0, 32], sizes = [64, 32], strides = [1, 1]} : vector<64x128xf32> to vector<64x32xf32>
    %140 = vector.broadcast %138 : vector<64x1xf32> to vector<64x32xf32>
    %141 = arith.mulf %140, %139 : vector<64x32xf32>
    %142 = arith.addf %137, %141 : vector<64x32xf32>
    %c0_47 = arith.constant 0 : index
    %c32_48 = arith.constant 32 : index
    %143 = vector.load %arg9[%c0_47, %c32_48] : memref<64x128xf32, #tpu.memory_space<vmem>>, vector<64x32xf32>
    tpu.vector_store %arg9[%c0_47, %c32_48], %142 {strides = array<i32>} : memref<64x128xf32, #tpu.memory_space<vmem>>, vector<64x32xf32>,
    %cst_49 = arith.constant 0.000000e+00 : f32
    %144 = vector.broadcast %cst_49 : f32 to vector<64x32xf32>
    %145 = vector.extract_strided_slice %2 {offsets = [0, 4], sizes = [64, 1], strides = [1, 1]} : vector<64x8xf32> to vector<64x1xf32>
    %146 = vector.extract_strided_slice %119 {offsets = [0, 64], sizes = [64, 32], strides = [1, 1]} : vector<64x128xf32> to vector<64x32xf32>
    %147 = vector.broadcast %145 : vector<64x1xf32> to vector<64x32xf32>
    %148 = arith.mulf %147, %146 : vector<64x32xf32>
    %149 = arith.addf %144, %148 : vector<64x32xf32>
    %150 = vector.extract_strided_slice %2 {offsets = [0, 6], sizes = [64, 1], strides = [1, 1]} : vector<64x8xf32> to vector<64x1xf32>
    %151 = vector.extract_strided_slice %119 {offsets = [0, 96], sizes = [64, 32], strides = [1, 1]} : vector<64x128xf32> to vector<64x32xf32>
    %152 = vector.broadcast %150 : vector<64x1xf32> to vector<64x32xf32>
    %153 = arith.mulf %152, %151 : vector<64x32xf32>
    %154 = arith.addf %149, %153 : vector<64x32xf32>
    %c0_50 = arith.constant 0 : index
    %c64_51 = arith.constant 64 : index
    %155 = vector.load %arg9[%c0_50, %c64_51] : memref<64x128xf32, #tpu.memory_space<vmem>>, vector<64x32xf32>
    tpu.vector_store %arg9[%c0_50, %c64_51], %154 {strides = array<i32>} : memref<64x128xf32, #tpu.memory_space<vmem>>, vector<64x32xf32>,
    %cst_52 = arith.constant 0.000000e+00 : f32
    %156 = vector.broadcast %cst_52 : f32 to vector<64x32xf32>
    %157 = vector.extract_strided_slice %2 {offsets = [0, 5], sizes = [64, 1], strides = [1, 1]} : vector<64x8xf32> to vector<64x1xf32>
    %158 = vector.extract_strided_slice %119 {offsets = [0, 64], sizes = [64, 32], strides = [1, 1]} : vector<64x128xf32> to vector<64x32xf32>
    %159 = vector.broadcast %157 : vector<64x1xf32> to vector<64x32xf32>
    %160 = arith.mulf %159, %158 : vector<64x32xf32>
    %161 = arith.addf %156, %160 : vector<64x32xf32>
    %162 = vector.extract_strided_slice %2 {offsets = [0, 7], sizes = [64, 1], strides = [1, 1]} : vector<64x8xf32> to vector<64x1xf32>
    %163 = vector.extract_strided_slice %119 {offsets = [0, 96], sizes = [64, 32], strides = [1, 1]} : vector<64x128xf32> to vector<64x32xf32>
    %164 = vector.broadcast %162 : vector<64x1xf32> to vector<64x32xf32>
    %165 = arith.mulf %164, %163 : vector<64x32xf32>
    %166 = arith.addf %161, %165 : vector<64x32xf32>
    %c0_53 = arith.constant 0 : index
    %c96_54 = arith.constant 96 : index
    %167 = vector.load %arg9[%c0_53, %c96_54] : memref<64x128xf32, #tpu.memory_space<vmem>>, vector<64x32xf32>
    tpu.vector_store %arg9[%c0_53, %c96_54], %166 {strides = array<i32>} : memref<64x128xf32, #tpu.memory_space<vmem>>, vector<64x32xf32>,
    return
  }
  func.func @transform_0(%arg0: i32) -> (i32, i32) {
    %c0_i32 = arith.constant 0 : i32
    %c0_i32_0 = arith.constant 0 : i32
    %c0_i32_1 = arith.constant 0 : i32
    return %c0_i32, %c0_i32_0 : i32, i32
  }
  func.func @transform_1(%arg0: i32) -> (i32, i32) {
    %c0_i32 = arith.constant 0 : i32
    %c0_i32_0 = arith.constant 0 : i32
    %c0_i32_1 = arith.constant 0 : i32
    return %c0_i32, %c0_i32_0 : i32, i32
  }
  func.func @transform_2(%arg0: i32) -> (i32, i32) {
    %c0_i32 = arith.constant 0 : i32
    %c0_i32_0 = arith.constant 0 : i32
    %c0_i32_1 = arith.constant 0 : i32
    return %c0_i32, %c0_i32_0 : i32, i32
  }
  func.func @transform_3(%arg0: i32) -> (i32, i32) {
    %c0_i32 = arith.constant 0 : i32
    %c0_i32_0 = arith.constant 0 : i32
    %c0_i32_1 = arith.constant 0 : i32
    return %c0_i32, %c0_i32_0 : i32, i32
  }
  func.func @transform_4(%arg0: i32) -> (i32, i32) {
    %c0_i32 = arith.constant 0 : i32
    %c0_i32_0 = arith.constant 0 : i32
    %c0_i32_1 = arith.constant 0 : i32
    return %c0_i32, %c0_i32_0 : i32, i32
  }
  func.func @transform_5(%arg0: i32) -> (i32, i32) {
    %c0_i32 = arith.constant 0 : i32
    %c0_i32_0 = arith.constant 0 : i32
    %c0_i32_1 = arith.constant 0 : i32
    return %c0_i32, %c0_i32_0 : i32, i32
  }
  func.func @transform_6(%arg0: i32) -> (i32, i32) {
    %c0_i32 = arith.constant 0 : i32
    %c0_i32_0 = arith.constant 0 : i32
    %c0_i32_1 = arith.constant 0 : i32
    return %c0_i32, %c0_i32_0 : i32, i32
  }
  func.func @transform_7(%arg0: i32) -> (i32, i32) {
    %c0_i32 = arith.constant 0 : i32
    %c0_i32_0 = arith.constant 0 : i32
    %c0_i32_1 = arith.constant 0 : i32
    return %c0_i32, %c0_i32_0 : i32, i32
  }
  func.func @transform_8(%arg0: i32) -> (i32, i32) {
    %c0_i32 = arith.constant 0 : i32
    %c0_i32_0 = arith.constant 0 : i32
    %c0_i32_1 = arith.constant 0 : i32
    return %c0_i32, %c0_i32_0 : i32, i32
  }
}

</mosaic_0001>

<llo_original>
// kernel: tpu_custom_call.1
$region0: #{tpu_custom_call.1}
  #allocation0 [shape = 'u32[]', space=smem, size = 0x4, offset = 0x4, fixed_abs, tag = 'smem constant byte address 0x4 - core index']
  #allocation1 [shape = 'u32[144,128]{1,0:T(1,128)}', space=vmem, size = 0x12000, scoped, tag = 'internal scratch']
  #allocation2 [shape = 'f32[64,128]{1,0:T(8,128)}', space=vmem, size = 0x8000, scoped, tag = 'scratch operand']
  %s0 = inlined_call_operand.hbm [shape: bf16[64,64], index: 0, kind: input, shape index: {}]
  %s1 = inlined_call_operand.vmem [shape: f32[64,128], index: 1, kind: input, shape index: {}]
  %s2 = inlined_call_operand.vmem [shape: f32[64,8], index: 2, kind: input, shape index: {}]
  %s3 = inlined_call_operand.hbm [shape: bf16[128,128], index: 3, kind: input, shape index: {}]
  %s4 = inlined_call_operand.hbm [shape: bf16[128,128], index: 4, kind: input, shape index: {}]
  %s5 = inlined_call_operand.vmem [shape: f32[1,128], index: 5, kind: input, shape index: {}]
  %s6 = inlined_call_operand.hbm [shape: bf16[128,128], index: 6, kind: input, shape index: {}]
  %s7 = inlined_call_operand.vmem [shape: f32[1,128], index: 7, kind: input, shape index: {}]
  %s8 = inlined_call_operand.hbm [shape: f32[64,128], index: 8, kind: output, shape index: {}]
  %s9 = sld [smem:[#allocation0]]
  $region58: #{tpu_custom_call.1} parent=0
    _
  %s11 = ssub.s32 1, %s9
  %s12 = scalar_select 0, %s11, %s9
  $region1: #{tpu_custom_call.1} parent=0
    #allocation3 [shape = 'u8[16384]{0}', space=vmem, size = 0x4000, scoped, tag = 'input window, operand 0, single buffered']
    #allocation4 [shape = 's32[1]{0}', space=sflag, size = 0x4, scoped, tag = 'scoped memory for tpu_custom_call.1']
    #allocation5 [shape = 's32[1]{0}', space=sflag, size = 0x4, scoped, tag = 'scoped memory for tpu_custom_call.1']
    #allocation6 [shape = 'u8[32768]{0}', space=vmem, size = 0x8000, scoped, tag = 'input window, operand 3, single buffered']
    #allocation7 [shape = 's32[1]{0}', space=sflag, size = 0x4, scoped, tag = 'scoped memory for tpu_custom_call.1']
    #allocation8 [shape = 'u8[32768]{0}', space=vmem, size = 0x8000, scoped, tag = 'input window, operand 4, single buffered']
    #allocation9 [shape = 'u8[32768]{0}', space=vmem, size = 0x8000, scoped, tag = 'input window, operand 6, single buffered']
    #allocation10 [shape = 's32[1]{0}', space=sflag, size = 0x4, scoped, tag = 'scoped memory for tpu_custom_call.1']
    #allocation11 [shape = 'u8[32768]{0}', space=vmem, size = 0x8000, scoped, tag = 'output window, operand 0, single buffered']
    %13 = vsyncpa [#allocation4], 0
    %14 = vsyncpa [#allocation7], 0
    %15 = vsyncpa [#allocation10], 0
    %16 = vsyncpa [#allocation5], 0
    // Predicated region
    $region2: #{tpu_custom_call.1} parent=1 // pred_check
      _
    $region3: #{tpu_custom_call.1} parent=1 // pred_check_branch
      %18 = sbr.rel (0) target = $region5
    $region4: #{tpu_custom_call.1} parent=1 // pred_region
      %s20 = ssub.s32 512, 512
      %21 = vsyncadd [#allocation4], %s20
      %s22 = sshll.u32 [#allocation3], 4
      %s23 = int_to_ptr.vmem [resolvable:$true] %s22
      %28 = dma.hbm_to_vmem [thread:$0]  %s0, 512, %s23, [#allocation4], 64, 64, 4
    $region5: #{tpu_custom_call.1} parent=1 // pred_fallthru
      _
    // Predicated region
    $region6: #{tpu_custom_call.1} parent=1 // pred_check
      _
    $region7: #{tpu_custom_call.1} parent=1 // pred_check_branch
      %30 = sbr.rel (0) target = $region9
    $region8: #{tpu_custom_call.1} parent=1 // pred_region
      _
    $region9: #{tpu_custom_call.1} parent=1 // pred_fallthru
      _
    // Predicated region
    $region10: #{tpu_custom_call.1} parent=1 // pred_check
      _
    $region11: #{tpu_custom_call.1} parent=1 // pred_check_branch
      %32 = sbr.rel (0) target = $region13
    $region12: #{tpu_custom_call.1} parent=1 // pred_region
      _
    $region13: #{tpu_custom_call.1} parent=1 // pred_fallthru
      _
    // Predicated region
    $region14: #{tpu_custom_call.1} parent=1 // pred_check
      _
    $region15: #{tpu_custom_call.1} parent=1 // pred_check_branch
      %34 = sbr.rel (0) target = $region17
    $region16: #{tpu_custom_call.1} parent=1 // pred_region
      %s36 = ssub.s32 1024, 1024
      %37 = vsyncadd [#allocation7], %s36
      %s38 = sshll.u32 [#allocation6], 4
      %s39 = int_to_ptr.vmem [resolvable:$true] %s38
      %44 = dma.hbm_to_vmem [thread:$0]  %s3, 1024, %s39, [#allocation7], 64, 64, 4
    $region17: #{tpu_custom_call.1} parent=1 // pred_fallthru
      _
    // Predicated region
    $region18: #{tpu_custom_call.1} parent=1 // pred_check
      _
    $region19: #{tpu_custom_call.1} parent=1 // pred_check_branch
      %46 = sbr.rel (0) target = $region21
    $region20: #{tpu_custom_call.1} parent=1 // pred_region
      %s48 = ssub.s32 1024, 1024
      %49 = vsyncadd [#allocation7], %s48
      %s50 = sshll.u32 [#allocation8], 4
      %s51 = int_to_ptr.vmem [resolvable:$true] %s50
      %56 = dma.hbm_to_vmem [thread:$0]  %s4, 1024, %s51, [#allocation7], 64, 64, 4
    $region21: #{tpu_custom_call.1} parent=1 // pred_fallthru
      _
    // Predicated region
    $region22: #{tpu_custom_call.1} parent=1 // pred_check
      _
    $region23: #{tpu_custom_call.1} parent=1 // pred_check_branch
      %58 = sbr.rel (0) target = $region25
    $region24: #{tpu_custom_call.1} parent=1 // pred_region
      _
    $region25: #{tpu_custom_call.1} parent=1 // pred_fallthru
      _
    // Predicated region
    $region26: #{tpu_custom_call.1} parent=1 // pred_check
      _
    $region27: #{tpu_custom_call.1} parent=1 // pred_check_branch
      %60 = sbr.rel (0) target = $region29
    $region28: #{tpu_custom_call.1} parent=1 // pred_region
      %s62 = ssub.s32 1024, 1024
      %63 = vsyncadd [#allocation10], %s62
      %s64 = sshll.u32 [#allocation9], 4
      %s65 = int_to_ptr.vmem [resolvable:$true] %s64
      %70 = dma.hbm_to_vmem [thread:$0]  %s6, 1024, %s65, [#allocation10], 64, 64, 4
    $region29: #{tpu_custom_call.1} parent=1 // pred_fallthru
      _
    // Predicated region
    $region30: #{tpu_custom_call.1} parent=1 // pred_check
      _
    $region31: #{tpu_custom_call.1} parent=1 // pred_check_branch
      %72 = sbr.rel (0) target = $region33
    $region32: #{tpu_custom_call.1} parent=1 // pred_region
      _
    $region33: #{tpu_custom_call.1} parent=1 // pred_fallthru
      _
    // Predicated region
    $region34: #{tpu_custom_call.1} parent=1 // pred_check
      _
    $region35: #{tpu_custom_call.1} parent=1 // pred_check_branch
      %74 = sbr.rel (0) target = $region37
    $region36: #{tpu_custom_call.1} parent=1 // pred_region
      %75 = dma.done [#allocation4], 512
    $region37: #{tpu_custom_call.1} parent=1 // pred_fallthru
      _
    // Predicated region
    $region38: #{tpu_custom_call.1} parent=1 // pred_check
      _
    $region39: #{tpu_custom_call.1} parent=1 // pred_check_branch
      %77 = sbr.rel (0) target = $region41
    $region40: #{tpu_custom_call.1} parent=1 // pred_region
      %78 = dma.done [#allocation7], 1024
    $region41: #{tpu_custom_call.1} parent=1 // pred_fallthru
      _
    // Predicated region
    $region42: #{tpu_custom_call.1} parent=1 // pred_check
      _
    $region43: #{tpu_custom_call.1} parent=1 // pred_check_branch
      %80 = sbr.rel (0) target = $region45
    $region44: #{tpu_custom_call.1} parent=1 // pred_region
      %81 = dma.done [#allocation7], 1024
    $region45: #{tpu_custom_call.1} parent=1 // pred_fallthru
      _
    // Predicated region
    $region46: #{tpu_custom_call.1} parent=1 // pred_check
      _
    $region47: #{tpu_custom_call.1} parent=1 // pred_check_branch
      %83 = sbr.rel (0) target = $region49
    $region48: #{tpu_custom_call.1} parent=1 // pred_region
      %84 = dma.done [#allocation10], 1024
    $region49: #{tpu_custom_call.1} parent=1 // pred_fallthru
      _
    %v86 = vld [vmem:[#allocation3] sm:$0xf]
    %v87 = vld [vmem:[#allocation3 + $0x4] sm:$0xf]
    %v88 = vld [vmem:[#allocation3 + $0x8] sm:$0xf]
    %v89 = vld [vmem:[#allocation3 + $0xc] sm:$0xf]
    %v90 = vld [vmem:[#allocation3 + $0x10] sm:$0xf]
    %v91 = vld [vmem:[#allocation3 + $0x14] sm:$0xf]
    %v92 = vld [vmem:[#allocation3 + $0x18] sm:$0xf]
    %v93 = vld [vmem:[#allocation3 + $0x1c] sm:$0xf]
    %v94 = vld [vmem:[%s1] sm:$0xff]
    %v95 = vld [vmem:[%s1 + $0x8] sm:$0xff]
    %v96 = vld [vmem:[%s1 + $0x10] sm:$0xff]
    %v97 = vld [vmem:[%s1 + $0x18] sm:$0xff]
    %v98 = vld [vmem:[%s1 + $0x20] sm:$0xff]
    %v99 = vld [vmem:[%s1 + $0x28] sm:$0xff]
    %v100 = vld [vmem:[%s1 + $0x30] sm:$0xff]
    %v101 = vld [vmem:[%s1 + $0x38] sm:$0xff]
    %v102 = vld [vmem:[%s2] sm:$0xff]
    %v103 = vld [vmem:[%s2 + $0x8] sm:$0xff]
    %v104 = vld [vmem:[%s2 + $0x10] sm:$0xff]
    %v105 = vld [vmem:[%s2 + $0x18] sm:$0xff]
    %v106 = vld [vmem:[%s2 + $0x20] sm:$0xff]
    %v107 = vld [vmem:[%s2 + $0x28] sm:$0xff]
    %v108 = vld [vmem:[%s2 + $0x30] sm:$0xff]
    %v109 = vld [vmem:[%s2 + $0x38] sm:$0xff]
    %v110 = vunpack.c.l.bf16 %v86
    %v111 = vunpack.c.l.bf16 %v87
    %v112 = vunpack.c.l.bf16 %v88
    %v113 = vunpack.c.l.bf16 %v89
    %v114 = vunpack.c.l.bf16 %v90
    %v115 = vunpack.c.l.bf16 %v91
    %v116 = vunpack.c.l.bf16 %v92
    %v117 = vunpack.c.l.bf16 %v93
    %vm118 = vcmask 523264
    %v119 = vsel %vm118, %v110, 0.0
    %120 = vadd.xlane.f32.xlu0 %v119
    %v121 = vpop.xlane.xlu0 %120
    %v122 = vsel %vm118, %v111, 0.0
    %123 = vadd.xlane.f32.xlu0 %v122
    %v124 = vpop.xlane.xlu0 %123
    %v125 = vsel %vm118, %v112, 0.0
    %126 = vadd.xlane.f32.xlu0 %v125
    %v127 = vpop.xlane.xlu0 %126
    %v128 = vsel %vm118, %v113, 0.0
    %129 = vadd.xlane.f32.xlu0 %v128
    %v130 = vpop.xlane.xlu0 %129
    %v131 = vsel %vm118, %v114, 0.0
    %132 = vadd.xlane.f32.xlu0 %v131
    %v133 = vpop.xlane.xlu0 %132
    %v134 = vsel %vm118, %v115, 0.0
    %135 = vadd.xlane.f32.xlu0 %v134
    %v136 = vpop.xlane.xlu0 %135
    %v137 = vsel %vm118, %v116, 0.0
    %138 = vadd.xlane.f32.xlu0 %v137
    %v139 = vpop.xlane.xlu0 %138
    %v140 = vsel %vm118, %v117, 0.0
    %141 = vadd.xlane.f32.xlu0 %v140
    %v142 = vpop.xlane.xlu0 %141
    %vm143 = vcmp.gt.f32.partialorder %v121, 0.0
    %vm144 = vcmp.gt.f32.partialorder %v124, 0.0
    %vm145 = vcmp.gt.f32.partialorder %v127, 0.0
    %vm146 = vcmp.gt.f32.partialorder %v130, 0.0
    %vm147 = vcmp.gt.f32.partialorder %v133, 0.0
    %vm148 = vcmp.gt.f32.partialorder %v136, 0.0
    %vm149 = vcmp.gt.f32.partialorder %v139, 0.0
    %vm150 = vcmp.gt.f32.partialorder %v142, 0.0
    %v151 = vmax.f32 %v121, 1.0
    %v152 = vmax.f32 %v124, 1.0
    %v153 = vmax.f32 %v127, 1.0
    %v154 = vmax.f32 %v130, 1.0
    %v155 = vmax.f32 %v133, 1.0
    %v156 = vmax.f32 %v136, 1.0
    %v157 = vmax.f32 %v139, 1.0
    %v158 = vmax.f32 %v142, 1.0
    %v159 = vrsqrt.pop %v151
    %v160 = vrsqrt.pop %v152
    %v161 = vrsqrt.pop %v153
    %v162 = vrsqrt.pop %v154
    %v163 = vrsqrt.pop %v155
    %v164 = vrsqrt.pop %v156
    %v165 = vrsqrt.pop %v157
    %v166 = vrsqrt.pop %v158
    %v167 = vsel %vm143, %v159, 0.0
    %v168 = vsel %vm144, %v160, 0.0
    %v169 = vsel %vm145, %v161, 0.0
    %v170 = vsel %vm146, %v162, 0.0
    %v171 = vsel %vm147, %v163, 0.0
    %v172 = vsel %vm148, %v164, 0.0
    %v173 = vsel %vm149, %v165, 0.0
    %v174 = vsel %vm150, %v166, 0.0
    %176 = vset.pattern.permute.xlu0 0
    %177 = vperm.xlu0 %176, %v102
    %v178 = vpop.permute.xlu0 %177
    %181 = vset.pattern.permute.xlu0 0
    %182 = vperm.xlu0 %181, %v103
    %v183 = vpop.permute.xlu0 %182
    %186 = vset.pattern.permute.xlu0 0
    %187 = vperm.xlu0 %186, %v104
    %v188 = vpop.permute.xlu0 %187
    %191 = vset.pattern.permute.xlu0 0
    %192 = vperm.xlu0 %191, %v105
    %v193 = vpop.permute.xlu0 %192
    %196 = vset.pattern.permute.xlu0 0
    %197 = vperm.xlu0 %196, %v106
    %v198 = vpop.permute.xlu0 %197
    %201 = vset.pattern.permute.xlu0 0
    %202 = vperm.xlu0 %201, %v107
    %v203 = vpop.permute.xlu0 %202
    %206 = vset.pattern.permute.xlu0 0
    %207 = vperm.xlu0 %206, %v108
    %v208 = vpop.permute.xlu0 %207
    %211 = vset.pattern.permute.xlu0 0
    %212 = vperm.xlu0 %211, %v109
    %v213 = vpop.permute.xlu0 %212
    %v215 = vmul.f32 %v178, %v94
    %v216 = vmul.f32 %v183, %v95
    %v217 = vmul.f32 %v188, %v96
    %v218 = vmul.f32 %v193, %v97
    %v219 = vmul.f32 %v198, %v98
    %v220 = vmul.f32 %v203, %v99
    %v221 = vmul.f32 %v208, %v100
    %v222 = vmul.f32 %v213, %v101
    %v223 = vadd.f32 %v215, 0.0
    %v224 = vadd.f32 %v216, 0.0
    %v225 = vadd.f32 %v217, 0.0
    %v226 = vadd.f32 %v218, 0.0
    %v227 = vadd.f32 %v219, 0.0
    %v228 = vadd.f32 %v220, 0.0
    %v229 = vadd.f32 %v221, 0.0
    %v230 = vadd.f32 %v222, 0.0
    %231 = vset.pattern.permute.xlu0 1
    %232 = vperm.xlu0 %231, %v102
    %v233 = vpop.permute.xlu0 %232
    %235 = vset.pattern.permute.xlu0 1
    %236 = vperm.xlu0 %235, %v103
    %v237 = vpop.permute.xlu0 %236
    %239 = vset.pattern.permute.xlu0 1
    %240 = vperm.xlu0 %239, %v104
    %v241 = vpop.permute.xlu0 %240
    %243 = vset.pattern.permute.xlu0 1
    %244 = vperm.xlu0 %243, %v105
    %v245 = vpop.permute.xlu0 %244
    %247 = vset.pattern.permute.xlu0 1
    %248 = vperm.xlu0 %247, %v106
    %v249 = vpop.permute.xlu0 %248
    %251 = vset.pattern.permute.xlu0 1
    %252 = vperm.xlu0 %251, %v107
    %v253 = vpop.permute.xlu0 %252
    %255 = vset.pattern.permute.xlu0 1
    %256 = vperm.xlu0 %255, %v108
    %v257 = vpop.permute.xlu0 %256
    %259 = vset.pattern.permute.xlu0 1
    %260 = vperm.xlu0 %259, %v109
    %v261 = vpop.permute.xlu0 %260
    %v263 = vmul.f32 %v233, %v94
    %v264 = vmul.f32 %v237, %v95
    %v265 = vmul.f32 %v241, %v96
    %v266 = vmul.f32 %v245, %v97
    %v267 = vmul.f32 %v249, %v98
    %v268 = vmul.f32 %v253, %v99
    %v269 = vmul.f32 %v257, %v100
    %v270 = vmul.f32 %v261, %v101
    %279 = vrot.lane.b32.xlu0 %v263, 96
    %v280 = vpop.permute.xlu0 %279
    %281 = vrot.lane.b32.xlu0 %v264, 96
    %v282 = vpop.permute.xlu0 %281
    %283 = vrot.lane.b32.xlu0 %v265, 96
    %v284 = vpop.permute.xlu0 %283
    %285 = vrot.lane.b32.xlu0 %v266, 96
    %v286 = vpop.permute.xlu0 %285
    %287 = vrot.lane.b32.xlu0 %v267, 96
    %v288 = vpop.permute.xlu0 %287
    %289 = vrot.lane.b32.xlu0 %v268, 96
    %v290 = vpop.permute.xlu0 %289
    %291 = vrot.lane.b32.xlu0 %v269, 96
    %v292 = vpop.permute.xlu0 %291
    %293 = vrot.lane.b32.xlu0 %v270, 96
    %v294 = vpop.permute.xlu0 %293
    %v303 = vadd.f32 %v223, %v280
    %v304 = vadd.f32 %v224, %v282
    %v305 = vadd.f32 %v225, %v284
    %v306 = vadd.f32 %v226, %v286
    %v307 = vadd.f32 %v227, %v288
    %v308 = vadd.f32 %v228, %v290
    %v309 = vadd.f32 %v229, %v292
    %v310 = vadd.f32 %v230, %v294
    %vm311 = vcmask 261120
    %312 = vst.msk [vmem:[#allocation2] sm:$0xff] %vm311, %v303
    %313 = vst.msk [vmem:[#allocation2 + $0x8] sm:$0xff] %vm311, %v304
    %314 = vst.msk [vmem:[#allocation2 + $0x10] sm:$0xff] %vm311, %v305
    %315 = vst.msk [vmem:[#allocation2 + $0x18] sm:$0xff] %vm311, %v306
    %316 = vst.msk [vmem:[#allocation2 + $0x20] sm:$0xff] %vm311, %v307
    %317 = vst.msk [vmem:[#allocation2 + $0x28] sm:$0xff] %vm311, %v308
    %318 = vst.msk [vmem:[#allocation2 + $0x30] sm:$0xff] %vm311, %v309
    %319 = vst.msk [vmem:[#allocation2 + $0x38] sm:$0xff] %vm311, %v310
    %320 = vset.pattern.permute.xlu0 2
    %321 = vperm.xlu0 %320, %v102
    %v322 = vpop.permute.xlu0 %321
    %324 = vset.pattern.permute.xlu0 2
    %325 = vperm.xlu0 %324, %v103
    %v326 = vpop.permute.xlu0 %325
    %328 = vset.pattern.permute.xlu0 2
    %329 = vperm.xlu0 %328, %v104
    %v330 = vpop.permute.xlu0 %329
    %332 = vset.pattern.permute.xlu0 2
    %333 = vperm.xlu0 %332, %v105
    %v334 = vpop.permute.xlu0 %333
    %336 = vset.pattern.permute.xlu0 2
    %337 = vperm.xlu0 %336, %v106
    %v338 = vpop.permute.xlu0 %337
    %340 = vset.pattern.permute.xlu0 2
    %341 = vperm.xlu0 %340, %v107
    %v342 = vpop.permute.xlu0 %341
    %344 = vset.pattern.permute.xlu0 2
    %345 = vperm.xlu0 %344, %v108
    %v346 = vpop.permute.xlu0 %345
    %348 = vset.pattern.permute.xlu0 2
    %349 = vperm.xlu0 %348, %v109
    %v350 = vpop.permute.xlu0 %349
    %v352 = vmul.f32 %v322, %v94
    %v353 = vmul.f32 %v326, %v95
    %v354 = vmul.f32 %v330, %v96
    %v355 = vmul.f32 %v334, %v97
    %v356 = vmul.f32 %v338, %v98
    %v357 = vmul.f32 %v342, %v99
    %v358 = vmul.f32 %v346, %v100
    %v359 = vmul.f32 %v350, %v101
    %v360 = vadd.f32 %v352, 0.0
    %v361 = vadd.f32 %v353, 0.0
    %v362 = vadd.f32 %v354, 0.0
    %v363 = vadd.f32 %v355, 0.0
    %v364 = vadd.f32 %v356, 0.0
    %v365 = vadd.f32 %v357, 0.0
    %v366 = vadd.f32 %v358, 0.0
    %v367 = vadd.f32 %v359, 0.0
    %368 = vset.pattern.permute.xlu0 3
    %369 = vperm.xlu0 %368, %v102
    %v370 = vpop.permute.xlu0 %369
    %372 = vset.pattern.permute.xlu0 3
    %373 = vperm.xlu0 %372, %v103
    %v374 = vpop.permute.xlu0 %373
    %376 = vset.pattern.permute.xlu0 3
    %377 = vperm.xlu0 %376, %v104
    %v378 = vpop.permute.xlu0 %377
    %380 = vset.pattern.permute.xlu0 3
    %381 = vperm.xlu0 %380, %v105
    %v382 = vpop.permute.xlu0 %381
    %384 = vset.pattern.permute.xlu0 3
    %385 = vperm.xlu0 %384, %v106
    %v386 = vpop.permute.xlu0 %385
    %388 = vset.pattern.permute.xlu0 3
    %389 = vperm.xlu0 %388, %v107
    %v390 = vpop.permute.xlu0 %389
    %392 = vset.pattern.permute.xlu0 3
    %393 = vperm.xlu0 %392, %v108
    %v394 = vpop.permute.xlu0 %393
    %396 = vset.pattern.permute.xlu0 3
    %397 = vperm.xlu0 %396, %v109
    %v398 = vpop.permute.xlu0 %397
    %v400 = vmul.f32 %v370, %v94
    %v401 = vmul.f32 %v374, %v95
    %v402 = vmul.f32 %v378, %v96
    %v403 = vmul.f32 %v382, %v97
    %v404 = vmul.f32 %v386, %v98
    %v405 = vmul.f32 %v390, %v99
    %v406 = vmul.f32 %v394, %v100
    %v407 = vmul.f32 %v398, %v101
    %416 = vrot.lane.b32.xlu0 %v400, 96
    %v417 = vpop.permute.xlu0 %416
    %418 = vrot.lane.b32.xlu0 %v401, 96
    %v419 = vpop.permute.xlu0 %418
    %420 = vrot.lane.b32.xlu0 %v402, 96
    %v421 = vpop.permute.xlu0 %420
    %422 = vrot.lane.b32.xlu0 %v403, 96
    %v423 = vpop.permute.xlu0 %422
    %424 = vrot.lane.b32.xlu0 %v404, 96
    %v425 = vpop.permute.xlu0 %424
    %426 = vrot.lane.b32.xlu0 %v405, 96
    %v427 = vpop.permute.xlu0 %426
    %428 = vrot.lane.b32.xlu0 %v406, 96
    %v429 = vpop.permute.xlu0 %428
    %430 = vrot.lane.b32.xlu0 %v407, 96
    %v431 = vpop.permute.xlu0 %430
    %v440 = vadd.f32 %v360, %v417
    %v441 = vadd.f32 %v361, %v419
    %v442 = vadd.f32 %v362, %v421
    %v443 = vadd.f32 %v363, %v423
    %v444 = vadd.f32 %v364, %v425
    %v445 = vadd.f32 %v365, %v427
    %v446 = vadd.f32 %v366, %v429
    %v447 = vadd.f32 %v367, %v431
    %456 = vrot.lane.b32.xlu0 %v440, 32
    %v457 = vpop.permute.xlu0 %456
    %458 = vrot.lane.b32.xlu0 %v441, 32
    %v459 = vpop.permute.xlu0 %458
    %460 = vrot.lane.b32.xlu0 %v442, 32
    %v461 = vpop.permute.xlu0 %460
    %462 = vrot.lane.b32.xlu0 %v443, 32
    %v463 = vpop.permute.xlu0 %462
    %464 = vrot.lane.b32.xlu0 %v444, 32
    %v465 = vpop.permute.xlu0 %464
    %466 = vrot.lane.b32.xlu0 %v445, 32
    %v467 = vpop.permute.xlu0 %466
    %468 = vrot.lane.b32.xlu0 %v446, 32
    %v469 = vpop.permute.xlu0 %468
    %470 = vrot.lane.b32.xlu0 %v447, 32
    %v471 = vpop.permute.xlu0 %470
    %vm480 = vcmask 523520
    %481 = vst.msk [vmem:[#allocation2] sm:$0xff] %vm480, %v457
    %482 = vst.msk [vmem:[#allocation2 + $0x8] sm:$0xff] %vm480, %v459
    %483 = vst.msk [vmem:[#allocation2 + $0x10] sm:$0xff] %vm480, %v461
    %484 = vst.msk [vmem:[#allocation2 + $0x18] sm:$0xff] %vm480, %v463
    %485 = vst.msk [vmem:[#allocation2 + $0x20] sm:$0xff] %vm480, %v465
    %486 = vst.msk [vmem:[#allocation2 + $0x28] sm:$0xff] %vm480, %v467
    %487 = vst.msk [vmem:[#allocation2 + $0x30] sm:$0xff] %vm480, %v469
    %488 = vst.msk [vmem:[#allocation2 + $0x38] sm:$0xff] %vm480, %v471
    %489 = vset.pattern.permute.xlu0 4
    %490 = vperm.xlu0 %489, %v102
    %v491 = vpop.permute.xlu0 %490
    %493 = vset.pattern.permute.xlu0 4
    %494 = vperm.xlu0 %493, %v103
    %v495 = vpop.permute.xlu0 %494
    %497 = vset.pattern.permute.xlu0 4
    %498 = vperm.xlu0 %497, %v104
    %v499 = vpop.permute.xlu0 %498
    %501 = vset.pattern.permute.xlu0 4
    %502 = vperm.xlu0 %501, %v105
    %v503 = vpop.permute.xlu0 %502
    %505 = vset.pattern.permute.xlu0 4
    %506 = vperm.xlu0 %505, %v106
    %v507 = vpop.permute.xlu0 %506
    %509 = vset.pattern.permute.xlu0 4
    %510 = vperm.xlu0 %509, %v107
    %v511 = vpop.permute.xlu0 %510
    %513 = vset.pattern.permute.xlu0 4
    %514 = vperm.xlu0 %513, %v108
    %v515 = vpop.permute.xlu0 %514
    %517 = vset.pattern.permute.xlu0 4
    %518 = vperm.xlu0 %517, %v109
    %v519 = vpop.permute.xlu0 %518
    %v521 = vmul.f32 %v491, %v94
    %v522 = vmul.f32 %v495, %v95
    %v523 = vmul.f32 %v499, %v96
    %v524 = vmul.f32 %v503, %v97
    %v525 = vmul.f32 %v507, %v98
    %v526 = vmul.f32 %v511, %v99
    %v527 = vmul.f32 %v515, %v100
    %v528 = vmul.f32 %v519, %v101
    %v529 = vadd.f32 %v521, 0.0
    %v530 = vadd.f32 %v522, 0.0
    %v531 = vadd.f32 %v523, 0.0
    %v532 = vadd.f32 %v524, 0.0
    %v533 = vadd.f32 %v525, 0.0
    %v534 = vadd.f32 %v526, 0.0
    %v535 = vadd.f32 %v527, 0.0
    %v536 = vadd.f32 %v528, 0.0
    %537 = vset.pattern.permute.xlu0 5
    %538 = vperm.xlu0 %537, %v102
    %v539 = vpop.permute.xlu0 %538
    %541 = vset.pattern.permute.xlu0 5
    %542 = vperm.xlu0 %541, %v103
    %v543 = vpop.permute.xlu0 %542
    %545 = vset.pattern.permute.xlu0 5
    %546 = vperm.xlu0 %545, %v104
    %v547 = vpop.permute.xlu0 %546
    %549 = vset.pattern.permute.xlu0 5
    %550 = vperm.xlu0 %549, %v105
    %v551 = vpop.permute.xlu0 %550
    %553 = vset.pattern.permute.xlu0 5
    %554 = vperm.xlu0 %553, %v106
    %v555 = vpop.permute.xlu0 %554
    %557 = vset.pattern.permute.xlu0 5
    %558 = vperm.xlu0 %557, %v107
    %v559 = vpop.permute.xlu0 %558
    %561 = vset.pattern.permute.xlu0 5
    %562 = vperm.xlu0 %561, %v108
    %v563 = vpop.permute.xlu0 %562
    %565 = vset.pattern.permute.xlu0 5
    %566 = vperm.xlu0 %565, %v109
    %v567 = vpop.permute.xlu0 %566
    %v569 = vmul.f32 %v539, %v94
    %v570 = vmul.f32 %v543, %v95
    %v571 = vmul.f32 %v547, %v96
    %v572 = vmul.f32 %v551, %v97
    %v573 = vmul.f32 %v555, %v98
    %v574 = vmul.f32 %v559, %v99
    %v575 = vmul.f32 %v563, %v100
    %v576 = vmul.f32 %v567, %v101
    %585 = vrot.lane.b32.xlu0 %v569, 96
    %v586 = vpop.permute.xlu0 %585
    %587 = vrot.lane.b32.xlu0 %v570, 96
    %v588 = vpop.permute.xlu0 %587
    %589 = vrot.lane.b32.xlu0 %v571, 96
    %v590 = vpop.permute.xlu0 %589
    %591 = vrot.lane.b32.xlu0 %v572, 96
    %v592 = vpop.permute.xlu0 %591
    %593 = vrot.lane.b32.xlu0 %v573, 96
    %v594 = vpop.permute.xlu0 %593
    %595 = vrot.lane.b32.xlu0 %v574, 96
    %v596 = vpop.permute.xlu0 %595
    %597 = vrot.lane.b32.xlu0 %v575, 96
    %v598 = vpop.permute.xlu0 %597
    %599 = vrot.lane.b32.xlu0 %v576, 96
    %v600 = vpop.permute.xlu0 %599
    %v609 = vadd.f32 %v529, %v586
    %v610 = vadd.f32 %v530, %v588
    %v611 = vadd.f32 %v531, %v590
    %v612 = vadd.f32 %v532, %v592
    %v613 = vadd.f32 %v533, %v594
    %v614 = vadd.f32 %v534, %v596
    %v615 = vadd.f32 %v535, %v598
    %v616 = vadd.f32 %v536, %v600
    %vm617 = vcmask 785920
    %618 = vst.msk [vmem:[#allocation2] sm:$0xff] %vm617, %v609
    %619 = vst.msk [vmem:[#allocation2 + $0x8] sm:$0xff] %vm617, %v610
    %620 = vst.msk [vmem:[#allocation2 + $0x10] sm:$0xff] %vm617, %v611
    %621 = vst.msk [vmem:[#allocation2 + $0x18] sm:$0xff] %vm617, %v612
    %622 = vst.msk [vmem:[#allocation2 + $0x20] sm:$0xff] %vm617, %v613
    %623 = vst.msk [vmem:[#allocation2 + $0x28] sm:$0xff] %vm617, %v614
    %624 = vst.msk [vmem:[#allocation2 + $0x30] sm:$0xff] %vm617, %v615
    %625 = vst.msk [vmem:[#allocation2 + $0x38] sm:$0xff] %vm617, %v616
    %626 = vset.pattern.permute.xlu0 6
    %627 = vperm.xlu0 %626, %v102
    %v628 = vpop.permute.xlu0 %627
    %630 = vset.pattern.permute.xlu0 6
    %631 = vperm.xlu0 %630, %v103
    %v632 = vpop.permute.xlu0 %631
    %634 = vset.pattern.permute.xlu0 6
    %635 = vperm.xlu0 %634, %v104
    %v636 = vpop.permute.xlu0 %635
    %638 = vset.pattern.permute.xlu0 6
    %639 = vperm.xlu0 %638, %v105
    %v640 = vpop.permute.xlu0 %639
    %642 = vset.pattern.permute.xlu0 6
    %643 = vperm.xlu0 %642, %v106
    %v644 = vpop.permute.xlu0 %643
    %646 = vset.pattern.permute.xlu0 6
    %647 = vperm.xlu0 %646, %v107
    %v648 = vpop.permute.xlu0 %647
    %650 = vset.pattern.permute.xlu0 6
    %651 = vperm.xlu0 %650, %v108
    %v652 = vpop.permute.xlu0 %651
    %654 = vset.pattern.permute.xlu0 6
    %655 = vperm.xlu0 %654, %v109
    %v656 = vpop.permute.xlu0 %655
    %v658 = vmul.f32 %v628, %v94
    %v659 = vmul.f32 %v632, %v95
    %v660 = vmul.f32 %v636, %v96
    %v661 = vmul.f32 %v640, %v97
    %v662 = vmul.f32 %v644, %v98
    %v663 = vmul.f32 %v648, %v99
    %v664 = vmul.f32 %v652, %v100
    %v665 = vmul.f32 %v656, %v101
    %v666 = vadd.f32 %v658, 0.0
    %v667 = vadd.f32 %v659, 0.0
    %v668 = vadd.f32 %v660, 0.0
    %v669 = vadd.f32 %v661, 0.0
    %v670 = vadd.f32 %v662, 0.0
    %v671 = vadd.f32 %v663, 0.0
    %v672 = vadd.f32 %v664, 0.0
    %v673 = vadd.f32 %v665, 0.0
    %674 = vset.pattern.permute.xlu0 7
    %675 = vperm.xlu0 %674, %v102
    %v676 = vpop.permute.xlu0 %675
    %678 = vset.pattern.permute.xlu0 7
    %679 = vperm.xlu0 %678, %v103
    %v680 = vpop.permute.xlu0 %679
    %682 = vset.pattern.permute.xlu0 7
    %683 = vperm.xlu0 %682, %v104
    %v684 = vpop.permute.xlu0 %683
    %686 = vset.pattern.permute.xlu0 7
    %687 = vperm.xlu0 %686, %v105
    %v688 = vpop.permute.xlu0 %687
    %690 = vset.pattern.permute.xlu0 7
    %691 = vperm.xlu0 %690, %v106
    %v692 = vpop.permute.xlu0 %691
    %694 = vset.pattern.permute.xlu0 7
    %695 = vperm.xlu0 %694, %v107
    %v696 = vpop.permute.xlu0 %695
    %698 = vset.pattern.permute.xlu0 7
    %699 = vperm.xlu0 %698, %v108
    %v700 = vpop.permute.xlu0 %699
    %702 = vset.pattern.permute.xlu0 7
    %703 = vperm.xlu0 %702, %v109
    %v704 = vpop.permute.xlu0 %703
    %v706 = vmul.f32 %v676, %v94
    %v707 = vmul.f32 %v680, %v95
    %v708 = vmul.f32 %v684, %v96
    %v709 = vmul.f32 %v688, %v97
    %v710 = vmul.f32 %v692, %v98
    %v711 = vmul.f32 %v696, %v99
    %v712 = vmul.f32 %v700, %v100
    %v713 = vmul.f32 %v704, %v101
    %722 = vrot.lane.b32.xlu0 %v706, 96
    %v723 = vpop.permute.xlu0 %722
    %724 = vrot.lane.b32.xlu0 %v707, 96
    %v725 = vpop.permute.xlu0 %724
    %726 = vrot.lane.b32.xlu0 %v708, 96
    %v727 = vpop.permute.xlu0 %726
    %728 = vrot.lane.b32.xlu0 %v709, 96
    %v729 = vpop.permute.xlu0 %728
    %730 = vrot.lane.b32.xlu0 %v710, 96
    %v731 = vpop.permute.xlu0 %730
    %732 = vrot.lane.b32.xlu0 %v711, 96
    %v733 = vpop.permute.xlu0 %732
    %734 = vrot.lane.b32.xlu0 %v712, 96
    %v735 = vpop.permute.xlu0 %734
    %736 = vrot.lane.b32.xlu0 %v713, 96
    %v737 = vpop.permute.xlu0 %736
    %v746 = vadd.f32 %v666, %v723
    %v747 = vadd.f32 %v667, %v725
    %v748 = vadd.f32 %v668, %v727
    %v749 = vadd.f32 %v669, %v729
    %v750 = vadd.f32 %v670, %v731
    %v751 = vadd.f32 %v671, %v733
    %v752 = vadd.f32 %v672, %v735
    %v753 = vadd.f32 %v673, %v737
    %762 = vrot.lane.b32.xlu0 %v746, 32
    %v763 = vpop.permute.xlu0 %762
    %764 = vrot.lane.b32.xlu0 %v747, 32
    %v765 = vpop.permute.xlu0 %764
    %766 = vrot.lane.b32.xlu0 %v748, 32
    %v767 = vpop.permute.xlu0 %766
    %768 = vrot.lane.b32.xlu0 %v749, 32
    %v769 = vpop.permute.xlu0 %768
    %770 = vrot.lane.b32.xlu0 %v750, 32
    %v771 = vpop.permute.xlu0 %770
    %772 = vrot.lane.b32.xlu0 %v751, 32
    %v773 = vpop.permute.xlu0 %772
    %774 = vrot.lane.b32.xlu0 %v752, 32
    %v775 = vpop.permute.xlu0 %774
    %776 = vrot.lane.b32.xlu0 %v753, 32
    %v777 = vpop.permute.xlu0 %776
    %vm786 = vcmask 1048320
    %787 = vst.msk [vmem:[#allocation2] sm:$0xff] %vm786, %v763
    %788 = vst.msk [vmem:[#allocation2 + $0x8] sm:$0xff] %vm786, %v765
    %789 = vst.msk [vmem:[#allocation2 + $0x10] sm:$0xff] %vm786, %v767
    %790 = vst.msk [vmem:[#allocation2 + $0x18] sm:$0xff] %vm786, %v769
    %791 = vst.msk [vmem:[#allocation2 + $0x20] sm:$0xff] %vm786, %v771
    %792 = vst.msk [vmem:[#allocation2 + $0x28] sm:$0xff] %vm786, %v773
    %793 = vst.msk [vmem:[#allocation2 + $0x30] sm:$0xff] %vm786, %v775
    %794 = vst.msk [vmem:[#allocation2 + $0x38] sm:$0xff] %vm786, %v777
    %v795 = vld [vmem:[#allocation2] sm:$0xff]
    %v796 = vld [vmem:[#allocation2 + $0x8] sm:$0xff]
    %v797 = vld [vmem:[#allocation2 + $0x10] sm:$0xff]
    %v798 = vld [vmem:[#allocation2 + $0x18] sm:$0xff]
    %v799 = vld [vmem:[#allocation2 + $0x20] sm:$0xff]
    %v800 = vld [vmem:[#allocation2 + $0x28] sm:$0xff]
    %v801 = vld [vmem:[#allocation2 + $0x30] sm:$0xff]
    %v802 = vld [vmem:[#allocation2 + $0x38] sm:$0xff]
    %v803 = vmul.f32 %v167, %v795
    %v804 = vmul.f32 %v168, %v796
    %v805 = vmul.f32 %v169, %v797
    %v806 = vmul.f32 %v170, %v798
    %v807 = vmul.f32 %v171, %v799
    %v808 = vmul.f32 %v172, %v800
    %v809 = vmul.f32 %v173, %v801
    %v810 = vmul.f32 %v174, %v802
    %v811 = vpack.c.bf16 %v804, %v803
    %v812 = vpack.c.bf16 %v806, %v805
    %v813 = vpack.c.bf16 %v808, %v807
    %v814 = vpack.c.bf16 %v810, %v809
    %v823 = vunpack.c.l.b16 %v86
    %v824 = vunpack.c.l.b16 %v87
    %v825 = vunpack.c.l.b16 %v88
    %v826 = vunpack.c.l.b16 %v89
    %v827 = vunpack.c.l.b16 %v90
    %v828 = vunpack.c.l.b16 %v91
    %v829 = vunpack.c.l.b16 %v92
    %v830 = vunpack.c.l.b16 %v93
    %v831 = vpack.c.b16 %v824, %v823
    %v832 = vpack.c.b16 %v826, %v825
    %v833 = vpack.c.b16 %v828, %v827
    %v834 = vpack.c.b16 %v830, %v829
    %v836 = vsel %vm118, %v831, 0
    %v839 = vsel %vm118, %v832, 0
    %v842 = vsel %vm118, %v833, 0
    %v845 = vsel %vm118, %v834, 0
    %847 = vmatprep.subr.bf16.mxu0 0
    %848 = vmatpush1.bf16.msra.mxu0 %v811
    %849 = vmatprep.subr.bf16.mxu0 0
    %850 = vmatpush1.bf16.msra.mxu0 %v812
    %851 = vmatprep.subr.bf16.mxu0 0
    %852 = vmatpush1.bf16.msra.mxu0 %v813
    %853 = vmatprep.subr.bf16.mxu0 0
    %854 = vmatpush1.bf16.msra.mxu0 %v814
    %855 = vmatprep.subr.bf16.mxu0 0
    %856 = vmatpush1.bf16.msra.mxu0 0
    %857 = vmatprep.subr.bf16.mxu0 0
    %858 = vmatpush1.bf16.msra.mxu0 0
    %859 = vmatprep.subr.bf16.mxu0 0
    %860 = vmatpush1.bf16.msra.mxu0 0
    %861 = vmatprep.subr.bf16.mxu0 0
    %862 = vmatpush1.bf16.msra.mxu0 0
    %863 = vmatprep.subr.bf16.mxu0 0
    %864 = vmatpush1.bf16.msra.mxu0 0
    %865 = vmatprep.subr.bf16.mxu0 0
    %866 = vmatpush1.bf16.msra.mxu0 0
    %867 = vmatprep.subr.bf16.mxu0 0
    %868 = vmatpush1.bf16.msra.mxu0 0
    %869 = vmatprep.subr.bf16.mxu0 0
    %870 = vmatpush1.bf16.msra.mxu0 0
    %871 = vmatprep.subr.bf16.mxu0 0
    %872 = vmatpush1.bf16.msra.mxu0 0
    %873 = vmatprep.subr.bf16.mxu0 0
    %874 = vmatpush1.bf16.msra.mxu0 0
    %875 = vmatprep.subr.bf16.mxu0 0
    %876 = vmatpush1.bf16.msra.mxu0 0
    %877 = vmatprep.subr.bf16.mxu0 0
    %878 = vmatpush1.bf16.msra.mxu0 0
    %879 = vmatprep.mubr.bf16.mxu0 0
    %880 = vmatmul.mubr.bf16.gmra.mrb[0].mxu0 %v836
    %v881 = vpop.f32.mrb[0].mxu0
    %v882 = vadd.f32 0.0, %v881
    %v883 = vpop.f32.mrb[0].mxu0
    %v884 = vpop.f32.mrb[0].mxu0
    %v885 = vadd.f32 0.0, %v884
    %v886 = vpop.f32.mrb[0].mxu0
    %887 = vmatprep.mubr.bf16.mxu0 0
    %888 = vmatmul.mubr.bf16.gmra.mrb[0].mxu0 %v839
    %v889 = vpop.f32.mrb[0].mxu0
    %v890 = vadd.f32 0.0, %v889
    %v891 = vpop.f32.mrb[0].mxu0
    %v892 = vpop.f32.mrb[0].mxu0
    %v893 = vadd.f32 0.0, %v892
    %v894 = vpop.f32.mrb[0].mxu0
    %895 = vmatprep.mubr.bf16.mxu0 0
    %896 = vmatmul.mubr.bf16.gmra.mrb[0].mxu0 %v842
    %v897 = vpop.f32.mrb[0].mxu0
    %v898 = vadd.f32 0.0, %v897
    %v899 = vpop.f32.mrb[0].mxu0
    %v900 = vpop.f32.mrb[0].mxu0
    %v901 = vadd.f32 0.0, %v900
    %v902 = vpop.f32.mrb[0].mxu0
    %903 = vmatprep.mubr.bf16.mxu0 0
    %904 = vmatmul.mubr.bf16.gmra.mrb[0].mxu0 %v845
    %v905 = vpop.f32.mrb[0].mxu0
    %v906 = vadd.f32 0.0, %v905
    %v907 = vpop.f32.mrb[0].mxu0
    %v908 = vpop.f32.mrb[0].mxu0
    %v909 = vadd.f32 0.0, %v908
    %v910 = vpop.f32.mrb[0].mxu0
    %911 = vdwg.mxu0
    %v912 = vmul.f32 %v167, %v882
    %v913 = vmul.f32 %v168, %v885
    %v914 = vmul.f32 %v169, %v890
    %v915 = vmul.f32 %v170, %v893
    %v916 = vmul.f32 %v171, %v898
    %v917 = vmul.f32 %v172, %v901
    %v918 = vmul.f32 %v173, %v906
    %v919 = vmul.f32 %v174, %v909
    %v920 = vsub.f32 %v795, %v912
    %v921 = vsub.f32 %v796, %v913
    %v922 = vsub.f32 %v797, %v914
    %v923 = vsub.f32 %v798, %v915
    %v924 = vsub.f32 %v799, %v916
    %v925 = vsub.f32 %v800, %v917
    %v926 = vsub.f32 %v801, %v918
    %v927 = vsub.f32 %v802, %v919
    %v928 = vmul.f32 %v920, -0.1
    %v929 = vmul.f32 %v921, -0.1
    %v930 = vmul.f32 %v922, -0.1
    %v931 = vmul.f32 %v923, -0.1
    %v932 = vmul.f32 %v924, -0.1
    %v933 = vmul.f32 %v925, -0.1
    %v934 = vmul.f32 %v926, -0.1
    %v935 = vmul.f32 %v927, -0.1
    %v936 = vadd.f32 %v795, %v928
    %v937 = vadd.f32 %v796, %v929
    %v938 = vadd.f32 %v797, %v930
    %v939 = vadd.f32 %v798, %v931
    %v940 = vadd.f32 %v799, %v932
    %v941 = vadd.f32 %v800, %v933
    %v942 = vadd.f32 %v801, %v934
    %v943 = vadd.f32 %v802, %v935
    %v944 = vmul.f32 %v167, %v928
    %v945 = vmul.f32 %v168, %v929
    %v946 = vmul.f32 %v169, %v930
    %v947 = vmul.f32 %v170, %v931
    %v948 = vmul.f32 %v171, %v932
    %v949 = vmul.f32 %v172, %v933
    %v950 = vmul.f32 %v173, %v934
    %v951 = vmul.f32 %v174, %v935
    %v952 = vpack.c.bf16 %v945, %v944
    %v953 = vpack.c.bf16 %v947, %v946
    %v954 = vpack.c.bf16 %v949, %v948
    %v955 = vpack.c.bf16 %v951, %v950
    %956 = vmatprep.subr.bf16.mxu0 0
    %957 = vmatpush1.bf16.msra.mxu0 %v952
    %958 = vmatprep.subr.bf16.mxu0 0
    %959 = vmatpush1.bf16.msra.mxu0 %v953
    %960 = vmatprep.subr.bf16.mxu0 0
    %961 = vmatpush1.bf16.msra.mxu0 %v954
    %962 = vmatprep.subr.bf16.mxu0 0
    %963 = vmatpush1.bf16.msra.mxu0 %v955
    %964 = vmatprep.subr.bf16.mxu0 0
    %965 = vmatpush1.bf16.msra.mxu0 0
    %966 = vmatprep.subr.bf16.mxu0 0
    %967 = vmatpush1.bf16.msra.mxu0 0
    %968 = vmatprep.subr.bf16.mxu0 0
    %969 = vmatpush1.bf16.msra.mxu0 0
    %970 = vmatprep.subr.bf16.mxu0 0
    %971 = vmatpush1.bf16.msra.mxu0 0
    %972 = vmatprep.subr.bf16.mxu0 0
    %973 = vmatpush1.bf16.msra.mxu0 0
    %974 = vmatprep.subr.bf16.mxu0 0
    %975 = vmatpush1.bf16.msra.mxu0 0
    %976 = vmatprep.subr.bf16.mxu0 0
    %977 = vmatpush1.bf16.msra.mxu0 0
    %978 = vmatprep.subr.bf16.mxu0 0
    %979 = vmatpush1.bf16.msra.mxu0 0
    %980 = vmatprep.subr.bf16.mxu0 0
    %981 = vmatpush1.bf16.msra.mxu0 0
    %982 = vmatprep.subr.bf16.mxu0 0
    %983 = vmatpush1.bf16.msra.mxu0 0
    %984 = vmatprep.subr.bf16.mxu0 0
    %985 = vmatpush1.bf16.msra.mxu0 0
    %986 = vmatprep.subr.bf16.mxu0 0
    %987 = vmatpush1.bf16.msra.mxu0 0
    %988 = vmatprep.mubr.bf16.mxu0 0
    %989 = vmatmul.mubr.bf16.gmra.mrb[0].mxu0 %v836
    %v990 = vpop.f32.mrb[0].mxu0
    %v991 = vadd.f32 0.0, %v990
    %v992 = vpop.f32.mrb[0].mxu0
    %v993 = vpop.f32.mrb[0].mxu0
    %v994 = vadd.f32 0.0, %v993
    %v995 = vpop.f32.mrb[0].mxu0
    %996 = vmatprep.mubr.bf16.mxu0 0
    %997 = vmatmul.mubr.bf16.gmra.mrb[0].mxu0 %v839
    %v998 = vpop.f32.mrb[0].mxu0
    %v999 = vadd.f32 0.0, %v998
    %v1000 = vpop.f32.mrb[0].mxu0
    %v1001 = vpop.f32.mrb[0].mxu0
    %v1002 = vadd.f32 0.0, %v1001
    %v1003 = vpop.f32.mrb[0].mxu0
    %1004 = vmatprep.mubr.bf16.mxu0 0
    %1005 = vmatmul.mubr.bf16.gmra.mrb[0].mxu0 %v842
    %v1006 = vpop.f32.mrb[0].mxu0
    %v1007 = vadd.f32 0.0, %v1006
    %v1008 = vpop.f32.mrb[0].mxu0
    %v1009 = vpop.f32.mrb[0].mxu0
    %v1010 = vadd.f32 0.0, %v1009
    %v1011 = vpop.f32.mrb[0].mxu0
    %1012 = vmatprep.mubr.bf16.mxu0 0
    %1013 = vmatmul.mubr.bf16.gmra.mrb[0].mxu0 %v845
    %v1014 = vpop.f32.mrb[0].mxu0
    %v1015 = vadd.f32 0.0, %v1014
    %v1016 = vpop.f32.mrb[0].mxu0
    %v1017 = vpop.f32.mrb[0].mxu0
    %v1018 = vadd.f32 0.0, %v1017
    %v1019 = vpop.f32.mrb[0].mxu0
    %1020 = vdwg.mxu0
    %v1021 = vmul.f32 %v167, %v991
    %v1022 = vmul.f32 %v168, %v994
    %v1023 = vmul.f32 %v169, %v999
    %v1024 = vmul.f32 %v170, %v1002
    %v1025 = vmul.f32 %v171, %v1007
    %v1026 = vmul.f32 %v172, %v1010
    %v1027 = vmul.f32 %v173, %v1015
    %v1028 = vmul.f32 %v174, %v1018
    %v1029 = vsub.f32 %v928, %v1021
    %v1030 = vsub.f32 %v929, %v1022
    %v1031 = vsub.f32 %v930, %v1023
    %v1032 = vsub.f32 %v931, %v1024
    %v1033 = vsub.f32 %v932, %v1025
    %v1034 = vsub.f32 %v933, %v1026
    %v1035 = vsub.f32 %v934, %v1027
    %v1036 = vsub.f32 %v935, %v1028
    %v1037 = vmul.f32 %v1029, -0.05
    %v1038 = vmul.f32 %v1030, -0.05
    %v1039 = vmul.f32 %v1031, -0.05
    %v1040 = vmul.f32 %v1032, -0.05
    %v1041 = vmul.f32 %v1033, -0.05
    %v1042 = vmul.f32 %v1034, -0.05
    %v1043 = vmul.f32 %v1035, -0.05
    %v1044 = vmul.f32 %v1036, -0.05
    %v1045 = vadd.f32 %v936, %v1037
    %v1046 = vadd.f32 %v937, %v1038
    %v1047 = vadd.f32 %v938, %v1039
    %v1048 = vadd.f32 %v939, %v1040
    %v1049 = vadd.f32 %v940, %v1041
    %v1050 = vadd.f32 %v941, %v1042
    %v1051 = vadd.f32 %v942, %v1043
    %v1052 = vadd.f32 %v943, %v1044
    %v1053 = vmul.f32 %v167, %v1037
    %v1054 = vmul.f32 %v168, %v1038
    %v1055 = vmul.f32 %v169, %v1039
    %v1056 = vmul.f32 %v170, %v1040
    %v1057 = vmul.f32 %v171, %v1041
    %v1058 = vmul.f32 %v172, %v1042
    %v1059 = vmul.f32 %v173, %v1043
    %v1060 = vmul.f32 %v174, %v1044
    %v1061 = vpack.c.bf16 %v1054, %v1053
    %v1062 = vpack.c.bf16 %v1056, %v1055
    %v1063 = vpack.c.bf16 %v1058, %v1057
    %v1064 = vpack.c.bf16 %v1060, %v1059
    %1065 = vmatprep.subr.bf16.mxu0 0
    %1066 = vmatpush1.bf16.msra.mxu0 %v1061
    %1067 = vmatprep.subr.bf16.mxu0 0
    %1068 = vmatpush1.bf16.msra.mxu0 %v1062
    %1069 = vmatprep.subr.bf16.mxu0 0
    %1070 = vmatpush1.bf16.msra.mxu0 %v1063
    %1071 = vmatprep.subr.bf16.mxu0 0
    %1072 = vmatpush1.bf16.msra.mxu0 %v1064
    %1073 = vmatprep.subr.bf16.mxu0 0
    %1074 = vmatpush1.bf16.msra.mxu0 0
    %1075 = vmatprep.subr.bf16.mxu0 0
    %1076 = vmatpush1.bf16.msra.mxu0 0
    %1077 = vmatprep.subr.bf16.mxu0 0
    %1078 = vmatpush1.bf16.msra.mxu0 0
    %1079 = vmatprep.subr.bf16.mxu0 0
    %1080 = vmatpush1.bf16.msra.mxu0 0
    %1081 = vmatprep.subr.bf16.mxu0 0
    %1082 = vmatpush1.bf16.msra.mxu0 0
    %1083 = vmatprep.subr.bf16.mxu0 0
    %1084 = vmatpush1.bf16.msra.mxu0 0
    %1085 = vmatprep.subr.bf16.mxu0 0
    %1086 = vmatpush1.bf16.msra.mxu0 0
    %1087 = vmatprep.subr.bf16.mxu0 0
    %1088 = vmatpush1.bf16.msra.mxu0 0
    %1089 = vmatprep.subr.bf16.mxu0 0
    %1090 = vmatpush1.bf16.msra.mxu0 0
    %1091 = vmatprep.subr.bf16.mxu0 0
    %1092 = vmatpush1.bf16.msra.mxu0 0
    %1093 = vmatprep.subr.bf16.mxu0 0
    %1094 = vmatpush1.bf16.msra.mxu0 0
    %1095 = vmatprep.subr.bf16.mxu0 0
    %1096 = vmatpush1.bf16.msra.mxu0 0
    %1097 = vmatprep.mubr.bf16.mxu0 0
    %1098 = vmatmul.mubr.bf16.gmra.mrb[0].mxu0 %v836
    %v1099 = vpop.f32.mrb[0].mxu0
    %v1100 = vadd.f32 0.0, %v1099
    %v1101 = vpop.f32.mrb[0].mxu0
    %v1102 = vpop.f32.mrb[0].mxu0
    %v1103 = vadd.f32 0.0, %v1102
    %v1104 = vpop.f32.mrb[0].mxu0
    %1105 = vmatprep.mubr.bf16.mxu0 0
    %1106 = vmatmul.mubr.bf16.gmra.mrb[0].mxu0 %v839
    %v1107 = vpop.f32.mrb[0].mxu0
    %v1108 = vadd.f32 0.0, %v1107
    %v1109 = vpop.f32.mrb[0].mxu0
    %v1110 = vpop.f32.mrb[0].mxu0
    %v1111 = vadd.f32 0.0, %v1110
    %v1112 = vpop.f32.mrb[0].mxu0
    %1113 = vmatprep.mubr.bf16.mxu0 0
    %1114 = vmatmul.mubr.bf16.gmra.mrb[0].mxu0 %v842
    %v1115 = vpop.f32.mrb[0].mxu0
    %v1116 = vadd.f32 0.0, %v1115
    %v1117 = vpop.f32.mrb[0].mxu0
    %v1118 = vpop.f32.mrb[0].mxu0
    %v1119 = vadd.f32 0.0, %v1118
    %v1120 = vpop.f32.mrb[0].mxu0
    %1121 = vmatprep.mubr.bf16.mxu0 0
    %1122 = vmatmul.mubr.bf16.gmra.mrb[0].mxu0 %v845
    %v1123 = vpop.f32.mrb[0].mxu0
    %v1124 = vadd.f32 0.0, %v1123
    %v1125 = vpop.f32.mrb[0].mxu0
    %v1126 = vpop.f32.mrb[0].mxu0
    %v1127 = vadd.f32 0.0, %v1126
    %v1128 = vpop.f32.mrb[0].mxu0
    %1129 = vdwg.mxu0
    %v1130 = vmul.f32 %v167, %v1100
    %v1131 = vmul.f32 %v168, %v1103
    %v1132 = vmul.f32 %v169, %v1108
    %v1133 = vmul.f32 %v170, %v1111
    %v1134 = vmul.f32 %v171, %v1116
    %v1135 = vmul.f32 %v172, %v1119
    %v1136 = vmul.f32 %v173, %v1124
    %v1137 = vmul.f32 %v174, %v1127
    %v1138 = vsub.f32 %v1037, %v1130
    %v1139 = vsub.f32 %v1038, %v1131
    %v1140 = vsub.f32 %v1039, %v1132
    %v1141 = vsub.f32 %v1040, %v1133
    %v1142 = vsub.f32 %v1041, %v1134
    %v1143 = vsub.f32 %v1042, %v1135
    %v1144 = vsub.f32 %v1043, %v1136
    %v1145 = vsub.f32 %v1044, %v1137
    %v1146 = vmul.f32 %v1138, -0.033333335
    %v1147 = vmul.f32 %v1139, -0.033333335
    %v1148 = vmul.f32 %v1140, -0.033333335
    %v1149 = vmul.f32 %v1141, -0.033333335
    %v1150 = vmul.f32 %v1142, -0.033333335
    %v1151 = vmul.f32 %v1143, -0.033333335
    %v1152 = vmul.f32 %v1144, -0.033333335
    %v1153 = vmul.f32 %v1145, -0.033333335
    %v1154 = vadd.f32 %v1045, %v1146
    %v1155 = vadd.f32 %v1046, %v1147
    %v1156 = vadd.f32 %v1047, %v1148
    %v1157 = vadd.f32 %v1048, %v1149
    %v1158 = vadd.f32 %v1049, %v1150
    %v1159 = vadd.f32 %v1050, %v1151
    %v1160 = vadd.f32 %v1051, %v1152
    %v1161 = vadd.f32 %v1052, %v1153
    %v1162 = vmul.f32 %v167, %v1146
    %v1163 = vmul.f32 %v168, %v1147
    %v1164 = vmul.f32 %v169, %v1148
    %v1165 = vmul.f32 %v170, %v1149
    %v1166 = vmul.f32 %v171, %v1150
    %v1167 = vmul.f32 %v172, %v1151
    %v1168 = vmul.f32 %v173, %v1152
    %v1169 = vmul.f32 %v174, %v1153
    %v1170 = vpack.c.bf16 %v1163, %v1162
    %v1171 = vpack.c.bf16 %v1165, %v1164
    %v1172 = vpack.c.bf16 %v1167, %v1166
    %v1173 = vpack.c.bf16 %v1169, %v1168
    %1174 = vmatprep.subr.bf16.mxu0 0
    %1175 = vmatpush1.bf16.msra.mxu0 %v1170
    %1176 = vmatprep.subr.bf16.mxu0 0
    %1177 = vmatpush1.bf16.msra.mxu0 %v1171
    %1178 = vmatprep.subr.bf16.mxu0 0
    %1179 = vmatpush1.bf16.msra.mxu0 %v1172
    %1180 = vmatprep.subr.bf16.mxu0 0
    %1181 = vmatpush1.bf16.msra.mxu0 %v1173
    %1182 = vmatprep.subr.bf16.mxu0 0
    %1183 = vmatpush1.bf16.msra.mxu0 0
    %1184 = vmatprep.subr.bf16.mxu0 0
    %1185 = vmatpush1.bf16.msra.mxu0 0
    %1186 = vmatprep.subr.bf16.mxu0 0
    %1187 = vmatpush1.bf16.msra.mxu0 0
    %1188 = vmatprep.subr.bf16.mxu0 0
    %1189 = vmatpush1.bf16.msra.mxu0 0
    %1190 = vmatprep.subr.bf16.mxu0 0
    %1191 = vmatpush1.bf16.msra.mxu0 0
    %1192 = vmatprep.subr.bf16.mxu0 0
    %1193 = vmatpush1.bf16.msra.mxu0 0
    %1194 = vmatprep.subr.bf16.mxu0 0
    %1195 = vmatpush1.bf16.msra.mxu0 0
    %1196 = vmatprep.subr.bf16.mxu0 0
    %1197 = vmatpush1.bf16.msra.mxu0 0
    %1198 = vmatprep.subr.bf16.mxu0 0
    %1199 = vmatpush1.bf16.msra.mxu0 0
    %1200 = vmatprep.subr.bf16.mxu0 0
    %1201 = vmatpush1.bf16.msra.mxu0 0
    %1202 = vmatprep.subr.bf16.mxu0 0
    %1203 = vmatpush1.bf16.msra.mxu0 0
    %1204 = vmatprep.subr.bf16.mxu0 0
    %1205 = vmatpush1.bf16.msra.mxu0 0
    %1206 = vmatprep.mubr.bf16.mxu0 0
    %1207 = vmatmul.mubr.bf16.gmra.mrb[0].mxu0 %v836
    %v1208 = vpop.f32.mrb[0].mxu0
    %v1209 = vadd.f32 0.0, %v1208
    %v1210 = vpop.f32.mrb[0].mxu0
    %v1211 = vpop.f32.mrb[0].mxu0
    %v1212 = vadd.f32 0.0, %v1211
    %v1213 = vpop.f32.mrb[0].mxu0
    %1214 = vmatprep.mubr.bf16.mxu0 0
    %1215 = vmatmul.mubr.bf16.gmra.mrb[0].mxu0 %v839
    %v1216 = vpop.f32.mrb[0].mxu0
    %v1217 = vadd.f32 0.0, %v1216
    %v1218 = vpop.f32.mrb[0].mxu0
    %v1219 = vpop.f32.mrb[0].mxu0
    %v1220 = vadd.f32 0.0, %v1219
    %v1221 = vpop.f32.mrb[0].mxu0
    %1222 = vmatprep.mubr.bf16.mxu0 0
    %1223 = vmatmul.mubr.bf16.gmra.mrb[0].mxu0 %v842
    %v1224 = vpop.f32.mrb[0].mxu0
    %v1225 = vadd.f32 0.0, %v1224
    %v1226 = vpop.f32.mrb[0].mxu0
    %v1227 = vpop.f32.mrb[0].mxu0
    %v1228 = vadd.f32 0.0, %v1227
    %v1229 = vpop.f32.mrb[0].mxu0
    %1230 = vmatprep.mubr.bf16.mxu0 0
    %1231 = vmatmul.mubr.bf16.gmra.mrb[0].mxu0 %v845
    %v1232 = vpop.f32.mrb[0].mxu0
    %v1233 = vadd.f32 0.0, %v1232
    %v1234 = vpop.f32.mrb[0].mxu0
    %v1235 = vpop.f32.mrb[0].mxu0
    %v1236 = vadd.f32 0.0, %v1235
    %v1237 = vpop.f32.mrb[0].mxu0
    %1238 = vdwg.mxu0
    %v1239 = vmul.f32 %v167, %v1209
    %v1240 = vmul.f32 %v168, %v1212
    %v1241 = vmul.f32 %v169, %v1217
    %v1242 = vmul.f32 %v170, %v1220
    %v1243 = vmul.f32 %v171, %v1225
    %v1244 = vmul.f32 %v172, %v1228
    %v1245 = vmul.f32 %v173, %v1233
    %v1246 = vmul.f32 %v174, %v1236
    %v1247 = vsub.f32 %v1146, %v1239
    %v1248 = vsub.f32 %v1147, %v1240
    %v1249 = vsub.f32 %v1148, %v1241
    %v1250 = vsub.f32 %v1149, %v1242
    %v1251 = vsub.f32 %v1150, %v1243
    %v1252 = vsub.f32 %v1151, %v1244
    %v1253 = vsub.f32 %v1152, %v1245
    %v1254 = vsub.f32 %v1153, %v1246
    %v1255 = vmul.f32 %v1247, -0.025
    %v1256 = vmul.f32 %v1248, -0.025
    %v1257 = vmul.f32 %v1249, -0.025
    %v1258 = vmul.f32 %v1250, -0.025
    %v1259 = vmul.f32 %v1251, -0.025
    %v1260 = vmul.f32 %v1252, -0.025
    %v1261 = vmul.f32 %v1253, -0.025
    %v1262 = vmul.f32 %v1254, -0.025
    %v1263 = vadd.f32 %v1154, %v1255
    %v1264 = vadd.f32 %v1155, %v1256
    %v1265 = vadd.f32 %v1156, %v1257
    %v1266 = vadd.f32 %v1157, %v1258
    %v1267 = vadd.f32 %v1158, %v1259
    %v1268 = vadd.f32 %v1159, %v1260
    %v1269 = vadd.f32 %v1160, %v1261
    %v1270 = vadd.f32 %v1161, %v1262
    %v1271 = vpack.c.bf16 %v95, %v94
    %v1272 = vpack.c.bf16 %v97, %v96
    %v1273 = vpack.c.bf16 %v99, %v98
    %v1274 = vpack.c.bf16 %v101, %v100
    %v1275 = vld [vmem:[#allocation6] sm:$0xf]
    %v1276 = vld [vmem:[#allocation6 + $0x4] sm:$0xf]
    %v1277 = vld [vmem:[#allocation6 + $0x8] sm:$0xf]
    %v1278 = vld [vmem:[#allocation6 + $0xc] sm:$0xf]
    %v1279 = vld [vmem:[#allocation6 + $0x10] sm:$0xf]
    %v1280 = vld [vmem:[#allocation6 + $0x14] sm:$0xf]
    %v1281 = vld [vmem:[#allocation6 + $0x18] sm:$0xf]
    %v1282 = vld [vmem:[#allocation6 + $0x1c] sm:$0xf]
    %v1283 = vld [vmem:[#allocation6 + $0x20] sm:$0xf]
    %v1284 = vld [vmem:[#allocation6 + $0x24] sm:$0xf]
    %v1285 = vld [vmem:[#allocation6 + $0x28] sm:$0xf]
    %v1286 = vld [vmem:[#allocation6 + $0x2c] sm:$0xf]
    %v1287 = vld [vmem:[#allocation6 + $0x30] sm:$0xf]
    %v1288 = vld [vmem:[#allocation6 + $0x34] sm:$0xf]
    %v1289 = vld [vmem:[#allocation6 + $0x38] sm:$0xf]
    %v1290 = vld [vmem:[#allocation6 + $0x3c] sm:$0xf]
    %v1291 = vpack.c.bf16 %v1264, %v1263
    %v1292 = vpack.c.bf16 %v1266, %v1265
    %v1293 = vpack.c.bf16 %v1268, %v1267
    %v1294 = vpack.c.bf16 %v1270, %v1269
    %v1295 = vld [vmem:[#allocation8] sm:$0xf]
    %v1296 = vld [vmem:[#allocation8 + $0x4] sm:$0xf]
    %v1297 = vld [vmem:[#allocation8 + $0x8] sm:$0xf]
    %v1298 = vld [vmem:[#allocation8 + $0xc] sm:$0xf]
    %v1299 = vld [vmem:[#allocation8 + $0x10] sm:$0xf]
    %v1300 = vld [vmem:[#allocation8 + $0x14] sm:$0xf]
    %v1301 = vld [vmem:[#allocation8 + $0x18] sm:$0xf]
    %v1302 = vld [vmem:[#allocation8 + $0x1c] sm:$0xf]
    %v1303 = vld [vmem:[#allocation8 + $0x20] sm:$0xf]
    %v1304 = vld [vmem:[#allocation8 + $0x24] sm:$0xf]
    %v1305 = vld [vmem:[#allocation8 + $0x28] sm:$0xf]
    %v1306 = vld [vmem:[#allocation8 + $0x2c] sm:$0xf]
    %v1307 = vld [vmem:[#allocation8 + $0x30] sm:$0xf]
    %v1308 = vld [vmem:[#allocation8 + $0x34] sm:$0xf]
    %v1309 = vld [vmem:[#allocation8 + $0x38] sm:$0xf]
    %v1310 = vld [vmem:[#allocation8 + $0x3c] sm:$0xf]
    %v1327 = vunpack.c.l.b16 %v1295
    %v1328 = vunpack.c.l.b16 %v1296
    %v1329 = vunpack.c.l.b16 %v1297
    %v1330 = vunpack.c.l.b16 %v1298
    %v1331 = vunpack.c.l.b16 %v1299
    %v1332 = vunpack.c.l.b16 %v1300
    %v1333 = vunpack.c.l.b16 %v1301
    %v1334 = vunpack.c.l.b16 %v1302
    %v1335 = vunpack.c.l.b16 %v1303
    %v1336 = vunpack.c.l.b16 %v1304
    %v1337 = vunpack.c.l.b16 %v1305
    %v1338 = vunpack.c.l.b16 %v1306
    %v1339 = vunpack.c.l.b16 %v1307
    %v1340 = vunpack.c.l.b16 %v1308
    %v1341 = vunpack.c.l.b16 %v1309
    %v1342 = vunpack.c.l.b16 %v1310
    %v1343 = vpack.c.b16 %v1328, %v1327
    %v1344 = vpack.c.b16 %v1330, %v1329
    %v1345 = vpack.c.b16 %v1332, %v1331
    %v1346 = vpack.c.b16 %v1334, %v1333
    %v1347 = vpack.c.b16 %v1336, %v1335
    %v1348 = vpack.c.b16 %v1338, %v1337
    %v1349 = vpack.c.b16 %v1340, %v1339
    %v1350 = vpack.c.b16 %v1342, %v1341
    %1359 = vmatprep.subr.bf16.mxu0 0
    %1360 = vmatpush1.bf16.msra.mxu0 %v1343
    %1361 = vmatprep.subr.bf16.mxu0 0
    %1362 = vmatpush1.bf16.msra.mxu0 %v1344
    %1363 = vmatprep.subr.bf16.mxu0 0
    %1364 = vmatpush1.bf16.msra.mxu0 %v1345
    %1365 = vmatprep.subr.bf16.mxu0 0
    %1366 = vmatpush1.bf16.msra.mxu0 %v1346
    %1367 = vmatprep.subr.bf16.mxu0 0
    %1368 = vmatpush1.bf16.msra.mxu0 %v1347
    %1369 = vmatprep.subr.bf16.mxu0 0
    %1370 = vmatpush1.bf16.msra.mxu0 %v1348
    %1371 = vmatprep.subr.bf16.mxu0 0
    %1372 = vmatpush1.bf16.msra.mxu0 %v1349
    %1373 = vmatprep.subr.bf16.mxu0 0
    %1374 = vmatpush1.bf16.msra.mxu0 %v1350
    %1375 = vmatprep.subr.bf16.mxu0 0
    %1376 = vmatpush1.bf16.msra.mxu0 0
    %1377 = vmatprep.subr.bf16.mxu0 0
    %1378 = vmatpush1.bf16.msra.mxu0 0
    %1379 = vmatprep.subr.bf16.mxu0 0
    %1380 = vmatpush1.bf16.msra.mxu0 0
    %1381 = vmatprep.subr.bf16.mxu0 0
    %1382 = vmatpush1.bf16.msra.mxu0 0
    %1383 = vmatprep.subr.bf16.mxu0 0
    %1384 = vmatpush1.bf16.msra.mxu0 0
    %1385 = vmatprep.subr.bf16.mxu0 0
    %1386 = vmatpush1.bf16.msra.mxu0 0
    %1387 = vmatprep.subr.bf16.mxu0 0
    %1388 = vmatpush1.bf16.msra.mxu0 0
    %1389 = vmatprep.subr.bf16.mxu0 0
    %1390 = vmatpush1.bf16.msra.mxu0 0
    %1391 = vmatprep.mubr.bf16.mxu0 0
    %1392 = vmatmul.mubr.bf16.gmra.mrb[0].mxu0 %v1291
    %v1393 = vpop.f32.mrb[0].mxu0
    %v1394 = vadd.f32 0.0, %v1393
    %v1395 = vpop.f32.mrb[0].mxu0
    %v1396 = vpop.f32.mrb[0].mxu0
    %v1397 = vadd.f32 0.0, %v1396
    %v1398 = vpop.f32.mrb[0].mxu0
    %1399 = vmatprep.mubr.bf16.mxu0 0
    %1400 = vmatmul.mubr.bf16.gmra.mrb[0].mxu0 %v1292
    %v1401 = vpop.f32.mrb[0].mxu0
    %v1402 = vadd.f32 0.0, %v1401
    %v1403 = vpop.f32.mrb[0].mxu0
    %v1404 = vpop.f32.mrb[0].mxu0
    %v1405 = vadd.f32 0.0, %v1404
    %v1406 = vpop.f32.mrb[0].mxu0
    %1407 = vmatprep.mubr.bf16.mxu0 0
    %1408 = vmatmul.mubr.bf16.gmra.mrb[0].mxu0 %v1293
    %v1409 = vpop.f32.mrb[0].mxu0
    %v1410 = vadd.f32 0.0, %v1409
    %v1411 = vpop.f32.mrb[0].mxu0
    %v1412 = vpop.f32.mrb[0].mxu0
    %v1413 = vadd.f32 0.0, %v1412
    %v1414 = vpop.f32.mrb[0].mxu0
    %1415 = vmatprep.mubr.bf16.mxu0 0
    %1416 = vmatmul.mubr.bf16.gmra.mrb[0].mxu0 %v1294
    %v1417 = vpop.f32.mrb[0].mxu0
    %v1418 = vadd.f32 0.0, %v1417
    %v1419 = vpop.f32.mrb[0].mxu0
    %v1420 = vpop.f32.mrb[0].mxu0
    %v1421 = vadd.f32 0.0, %v1420
    %v1422 = vpop.f32.mrb[0].mxu0
    %1423 = vdwg.mxu0
    %v1440 = vunpack.c.l.b16 %v1275
    %v1441 = vunpack.c.l.b16 %v1276
    %v1442 = vunpack.c.l.b16 %v1277
    %v1443 = vunpack.c.l.b16 %v1278
    %v1444 = vunpack.c.l.b16 %v1279
    %v1445 = vunpack.c.l.b16 %v1280
    %v1446 = vunpack.c.l.b16 %v1281
    %v1447 = vunpack.c.l.b16 %v1282
    %v1448 = vunpack.c.l.b16 %v1283
    %v1449 = vunpack.c.l.b16 %v1284
    %v1450 = vunpack.c.l.b16 %v1285
    %v1451 = vunpack.c.l.b16 %v1286
    %v1452 = vunpack.c.l.b16 %v1287
    %v1453 = vunpack.c.l.b16 %v1288
    %v1454 = vunpack.c.l.b16 %v1289
    %v1455 = vunpack.c.l.b16 %v1290
    %v1456 = vpack.c.b16 %v1441, %v1440
    %v1457 = vpack.c.b16 %v1443, %v1442
    %v1458 = vpack.c.b16 %v1445, %v1444
    %v1459 = vpack.c.b16 %v1447, %v1446
    %v1460 = vpack.c.b16 %v1449, %v1448
    %v1461 = vpack.c.b16 %v1451, %v1450
    %v1462 = vpack.c.b16 %v1453, %v1452
    %v1463 = vpack.c.b16 %v1455, %v1454
    %1472 = vmatprep.subr.bf16.mxu0 0
    %1473 = vmatpush1.bf16.msra.mxu0 %v1456
    %1474 = vmatprep.subr.bf16.mxu0 0
    %1475 = vmatpush1.bf16.msra.mxu0 %v1457
    %1476 = vmatprep.subr.bf16.mxu0 0
    %1477 = vmatpush1.bf16.msra.mxu0 %v1458
    %1478 = vmatprep.subr.bf16.mxu0 0
    %1479 = vmatpush1.bf16.msra.mxu0 %v1459
    %1480 = vmatprep.subr.bf16.mxu0 0
    %1481 = vmatpush1.bf16.msra.mxu0 %v1460
    %1482 = vmatprep.subr.bf16.mxu0 0
    %1483 = vmatpush1.bf16.msra.mxu0 %v1461
    %1484 = vmatprep.subr.bf16.mxu0 0
    %1485 = vmatpush1.bf16.msra.mxu0 %v1462
    %1486 = vmatprep.subr.bf16.mxu0 0
    %1487 = vmatpush1.bf16.msra.mxu0 %v1463
    %1488 = vmatprep.subr.bf16.mxu0 0
    %1489 = vmatpush1.bf16.msra.mxu0 0
    %1490 = vmatprep.subr.bf16.mxu0 0
    %1491 = vmatpush1.bf16.msra.mxu0 0
    %1492 = vmatprep.subr.bf16.mxu0 0
    %1493 = vmatpush1.bf16.msra.mxu0 0
    %1494 = vmatprep.subr.bf16.mxu0 0
    %1495 = vmatpush1.bf16.msra.mxu0 0
    %1496 = vmatprep.subr.bf16.mxu0 0
    %1497 = vmatpush1.bf16.msra.mxu0 0
    %1498 = vmatprep.subr.bf16.mxu0 0
    %1499 = vmatpush1.bf16.msra.mxu0 0
    %1500 = vmatprep.subr.bf16.mxu0 0
    %1501 = vmatpush1.bf16.msra.mxu0 0
    %1502 = vmatprep.subr.bf16.mxu0 0
    %1503 = vmatpush1.bf16.msra.mxu0 0
    %1504 = vmatprep.mubr.bf16.mxu0 0
    %1505 = vmatmul.mubr.bf16.gmra.mrb[0].mxu0 %v1271
    %v1506 = vpop.f32.mrb[0].mxu0
    %v1507 = vadd.f32 %v1394, %v1506
    %v1508 = vpop.f32.mrb[0].mxu0
    %v1509 = vpop.f32.mrb[0].mxu0
    %v1510 = vadd.f32 %v1397, %v1509
    %v1511 = vpop.f32.mrb[0].mxu0
    %1512 = vmatprep.mubr.bf16.mxu0 0
    %1513 = vmatmul.mubr.bf16.gmra.mrb[0].mxu0 %v1272
    %v1514 = vpop.f32.mrb[0].mxu0
    %v1515 = vadd.f32 %v1402, %v1514
    %v1516 = vpop.f32.mrb[0].mxu0
    %v1517 = vpop.f32.mrb[0].mxu0
    %v1518 = vadd.f32 %v1405, %v1517
    %v1519 = vpop.f32.mrb[0].mxu0
    %1520 = vmatprep.mubr.bf16.mxu0 0
    %1521 = vmatmul.mubr.bf16.gmra.mrb[0].mxu0 %v1273
    %v1522 = vpop.f32.mrb[0].mxu0
    %v1523 = vadd.f32 %v1410, %v1522
    %v1524 = vpop.f32.mrb[0].mxu0
    %v1525 = vpop.f32.mrb[0].mxu0
    %v1526 = vadd.f32 %v1413, %v1525
    %v1527 = vpop.f32.mrb[0].mxu0
    %1528 = vmatprep.mubr.bf16.mxu0 0
    %1529 = vmatmul.mubr.bf16.gmra.mrb[0].mxu0 %v1274
    %v1530 = vpop.f32.mrb[0].mxu0
    %v1531 = vadd.f32 %v1418, %v1530
    %v1532 = vpop.f32.mrb[0].mxu0
    %v1533 = vpop.f32.mrb[0].mxu0
    %v1534 = vadd.f32 %v1421, %v1533
    %v1535 = vpop.f32.mrb[0].mxu0
    %1536 = vdwg.mxu0
    %v1537 = vld [vmem:[%s5] sm:$0x1]
    %v1539 = vlaneseq
    %v1540 = vshrl.u32 %v1539, 7
    %v1541 = vsub.s32 0, %v1540
    %v1542 = vrot.slane %v1537, %v1541
    %v1544 = vadd.f32 %v1507, %v1542
    %v1545 = vadd.f32 %v1510, %v1542
    %v1546 = vadd.f32 %v1515, %v1542
    %v1547 = vadd.f32 %v1518, %v1542
    %v1548 = vadd.f32 %v1523, %v1542
    %v1549 = vadd.f32 %v1526, %v1542
    %v1550 = vadd.f32 %v1531, %v1542
    %v1551 = vadd.f32 %v1534, %v1542
    %v1552 = vmul.f32 %v1544, 0.5
    %v1553 = vmul.f32 %v1545, 0.5
    %v1554 = vmul.f32 %v1546, 0.5
    %v1555 = vmul.f32 %v1547, 0.5
    %v1556 = vmul.f32 %v1548, 0.5
    %v1557 = vmul.f32 %v1549, 0.5
    %v1558 = vmul.f32 %v1550, 0.5
    %v1559 = vmul.f32 %v1551, 0.5
    %v1560 = vmul.f32 %v1544, 0.70710677
    %v1561 = vmul.f32 %v1545, 0.70710677
    %v1562 = vmul.f32 %v1546, 0.70710677
    %v1563 = vmul.f32 %v1547, 0.70710677
    %v1564 = vmul.f32 %v1548, 0.70710677
    %v1565 = vmul.f32 %v1549, 0.70710677
    %v1566 = vmul.f32 %v1550, 0.70710677
    %v1567 = vmul.f32 %v1551, 0.70710677
    %v1568 = verf.f32.pop %v1560
    %v1569 = verf.f32.pop %v1561
    %v1570 = verf.f32.pop %v1562
    %v1571 = verf.f32.pop %v1563
    %v1572 = verf.f32.pop %v1564
    %v1573 = verf.f32.pop %v1565
    %v1574 = verf.f32.pop %v1566
    %v1575 = verf.f32.pop %v1567
    %v1576 = vadd.f32 %v1568, 1.0
    %v1577 = vadd.f32 %v1569, 1.0
    %v1578 = vadd.f32 %v1570, 1.0
    %v1579 = vadd.f32 %v1571, 1.0
    %v1580 = vadd.f32 %v1572, 1.0
    %v1581 = vadd.f32 %v1573, 1.0
    %v1582 = vadd.f32 %v1574, 1.0
    %v1583 = vadd.f32 %v1575, 1.0
    %v1584 = vmul.f32 %v1552, %v1576
    %v1585 = vmul.f32 %v1553, %v1577
    %v1586 = vmul.f32 %v1554, %v1578
    %v1587 = vmul.f32 %v1555, %v1579
    %v1588 = vmul.f32 %v1556, %v1580
    %v1589 = vmul.f32 %v1557, %v1581
    %v1590 = vmul.f32 %v1558, %v1582
    %v1591 = vmul.f32 %v1559, %v1583
    %v1592 = vpack.c.bf16 %v1585, %v1584
    %v1593 = vpack.c.bf16 %v1587, %v1586
    %v1594 = vpack.c.bf16 %v1589, %v1588
    %v1595 = vpack.c.bf16 %v1591, %v1590
    %v1596 = vld [vmem:[#allocation9] sm:$0xf]
    %v1597 = vld [vmem:[#allocation9 + $0x4] sm:$0xf]
    %v1598 = vld [vmem:[#allocation9 + $0x8] sm:$0xf]
    %v1599 = vld [vmem:[#allocation9 + $0xc] sm:$0xf]
    %v1600 = vld [vmem:[#allocation9 + $0x10] sm:$0xf]
    %v1601 = vld [vmem:[#allocation9 + $0x14] sm:$0xf]
    %v1602 = vld [vmem:[#allocation9 + $0x18] sm:$0xf]
    %v1603 = vld [vmem:[#allocation9 + $0x1c] sm:$0xf]
    %v1604 = vld [vmem:[#allocation9 + $0x20] sm:$0xf]
    %v1605 = vld [vmem:[#allocation9 + $0x24] sm:$0xf]
    %v1606 = vld [vmem:[#allocation9 + $0x28] sm:$0xf]
    %v1607 = vld [vmem:[#allocation9 + $0x2c] sm:$0xf]
    %v1608 = vld [vmem:[#allocation9 + $0x30] sm:$0xf]
    %v1609 = vld [vmem:[#allocation9 + $0x34] sm:$0xf]
    %v1610 = vld [vmem:[#allocation9 + $0x38] sm:$0xf]
    %v1611 = vld [vmem:[#allocation9 + $0x3c] sm:$0xf]
    %v1612 = vld [vmem:[%s7] sm:$0x1]
    %v1614 = vlaneseq
    %v1615 = vshrl.u32 %v1614, 7
    %v1616 = vsub.s32 0, %v1615
    %v1617 = vrot.slane %v1612, %v1616
    %v1635 = vunpack.c.l.b16 %v1596
    %v1636 = vunpack.c.l.b16 %v1597
    %v1637 = vunpack.c.l.b16 %v1598
    %v1638 = vunpack.c.l.b16 %v1599
    %v1639 = vunpack.c.l.b16 %v1600
    %v1640 = vunpack.c.l.b16 %v1601
    %v1641 = vunpack.c.l.b16 %v1602
    %v1642 = vunpack.c.l.b16 %v1603
    %v1643 = vunpack.c.l.b16 %v1604
    %v1644 = vunpack.c.l.b16 %v1605
    %v1645 = vunpack.c.l.b16 %v1606
    %v1646 = vunpack.c.l.b16 %v1607
    %v1647 = vunpack.c.l.b16 %v1608
    %v1648 = vunpack.c.l.b16 %v1609
    %v1649 = vunpack.c.l.b16 %v1610
    %v1650 = vunpack.c.l.b16 %v1611
    %v1651 = vpack.c.b16 %v1636, %v1635
    %v1652 = vpack.c.b16 %v1638, %v1637
    %v1653 = vpack.c.b16 %v1640, %v1639
    %v1654 = vpack.c.b16 %v1642, %v1641
    %v1655 = vpack.c.b16 %v1644, %v1643
    %v1656 = vpack.c.b16 %v1646, %v1645
    %v1657 = vpack.c.b16 %v1648, %v1647
    %v1658 = vpack.c.b16 %v1650, %v1649
    %1667 = vmatprep.subr.bf16.mxu0 0
    %1668 = vmatpush1.bf16.msra.mxu0 %v1651
    %1669 = vmatprep.subr.bf16.mxu0 0
    %1670 = vmatpush1.bf16.msra.mxu0 %v1652
    %1671 = vmatprep.subr.bf16.mxu0 0
    %1672 = vmatpush1.bf16.msra.mxu0 %v1653
    %1673 = vmatprep.subr.bf16.mxu0 0
    %1674 = vmatpush1.bf16.msra.mxu0 %v1654
    %1675 = vmatprep.subr.bf16.mxu0 0
    %1676 = vmatpush1.bf16.msra.mxu0 %v1655
    %1677 = vmatprep.subr.bf16.mxu0 0
    %1678 = vmatpush1.bf16.msra.mxu0 %v1656
    %1679 = vmatprep.subr.bf16.mxu0 0
    %1680 = vmatpush1.bf16.msra.mxu0 %v1657
    %1681 = vmatprep.subr.bf16.mxu0 0
    %1682 = vmatpush1.bf16.msra.mxu0 %v1658
    %1683 = vmatprep.subr.bf16.mxu0 0
    %1684 = vmatpush1.bf16.msra.mxu0 0
    %1685 = vmatprep.subr.bf16.mxu0 0
    %1686 = vmatpush1.bf16.msra.mxu0 0
    %1687 = vmatprep.subr.bf16.mxu0 0
    %1688 = vmatpush1.bf16.msra.mxu0 0
    %1689 = vmatprep.subr.bf16.mxu0 0
    %1690 = vmatpush1.bf16.msra.mxu0 0
    %1691 = vmatprep.subr.bf16.mxu0 0
    %1692 = vmatpush1.bf16.msra.mxu0 0
    %1693 = vmatprep.subr.bf16.mxu0 0
    %1694 = vmatpush1.bf16.msra.mxu0 0
    %1695 = vmatprep.subr.bf16.mxu0 0
    %1696 = vmatpush1.bf16.msra.mxu0 0
    %1697 = vmatprep.subr.bf16.mxu0 0
    %1698 = vmatpush1.bf16.msra.mxu0 0
    %1699 = vmatprep.mubr.bf16.mxu0 0
    %1700 = vmatmul.mubr.bf16.gmra.mrb[0].mxu0 %v1592
    %v1701 = vpop.f32.mrb[0].mxu0
    %v1702 = vadd.f32 %v1617, %v1701
    %v1703 = vpop.f32.mrb[0].mxu0
    %v1704 = vpop.f32.mrb[0].mxu0
    %v1705 = vadd.f32 %v1617, %v1704
    %v1706 = vpop.f32.mrb[0].mxu0
    %1707 = vmatprep.mubr.bf16.mxu0 0
    %1708 = vmatmul.mubr.bf16.gmra.mrb[0].mxu0 %v1593
    %v1709 = vpop.f32.mrb[0].mxu0
    %v1710 = vadd.f32 %v1617, %v1709
    %v1711 = vpop.f32.mrb[0].mxu0
    %v1712 = vpop.f32.mrb[0].mxu0
    %v1713 = vadd.f32 %v1617, %v1712
    %v1714 = vpop.f32.mrb[0].mxu0
    %1715 = vmatprep.mubr.bf16.mxu0 0
    %1716 = vmatmul.mubr.bf16.gmra.mrb[0].mxu0 %v1594
    %v1717 = vpop.f32.mrb[0].mxu0
    %v1718 = vadd.f32 %v1617, %v1717
    %v1719 = vpop.f32.mrb[0].mxu0
    %v1720 = vpop.f32.mrb[0].mxu0
    %v1721 = vadd.f32 %v1617, %v1720
    %v1722 = vpop.f32.mrb[0].mxu0
    %1723 = vmatprep.mubr.bf16.mxu0 0
    %1724 = vmatmul.mubr.bf16.gmra.mrb[0].mxu0 %v1595
    %v1725 = vpop.f32.mrb[0].mxu0
    %v1726 = vadd.f32 %v1617, %v1725
    %v1727 = vpop.f32.mrb[0].mxu0
    %v1728 = vpop.f32.mrb[0].mxu0
    %v1729 = vadd.f32 %v1617, %v1728
    %v1730 = vpop.f32.mrb[0].mxu0
    %1731 = vdwg.mxu0
    %v1732 = vmul.f32 %v178, %v1702
    %v1733 = vmul.f32 %v183, %v1705
    %v1734 = vmul.f32 %v188, %v1710
    %v1735 = vmul.f32 %v193, %v1713
    %v1736 = vmul.f32 %v198, %v1718
    %v1737 = vmul.f32 %v203, %v1721
    %v1738 = vmul.f32 %v208, %v1726
    %v1739 = vmul.f32 %v213, %v1729
    %v1740 = vadd.f32 %v1732, 0.0
    %v1741 = vadd.f32 %v1733, 0.0
    %v1742 = vadd.f32 %v1734, 0.0
    %v1743 = vadd.f32 %v1735, 0.0
    %v1744 = vadd.f32 %v1736, 0.0
    %v1745 = vadd.f32 %v1737, 0.0
    %v1746 = vadd.f32 %v1738, 0.0
    %v1747 = vadd.f32 %v1739, 0.0
    %v1748 = vmul.f32 %v322, %v1702
    %v1749 = vmul.f32 %v326, %v1705
    %v1750 = vmul.f32 %v330, %v1710
    %v1751 = vmul.f32 %v334, %v1713
    %v1752 = vmul.f32 %v338, %v1718
    %v1753 = vmul.f32 %v342, %v1721
    %v1754 = vmul.f32 %v346, %v1726
    %v1755 = vmul.f32 %v350, %v1729
    %1764 = vrot.lane.b32.xlu0 %v1748, 96
    %v1765 = vpop.permute.xlu0 %1764
    %1766 = vrot.lane.b32.xlu0 %v1749, 96
    %v1767 = vpop.permute.xlu0 %1766
    %1768 = vrot.lane.b32.xlu0 %v1750, 96
    %v1769 = vpop.permute.xlu0 %1768
    %1770 = vrot.lane.b32.xlu0 %v1751, 96
    %v1771 = vpop.permute.xlu0 %1770
    %1772 = vrot.lane.b32.xlu0 %v1752, 96
    %v1773 = vpop.permute.xlu0 %1772
    %1774 = vrot.lane.b32.xlu0 %v1753, 96
    %v1775 = vpop.permute.xlu0 %1774
    %1776 = vrot.lane.b32.xlu0 %v1754, 96
    %v1777 = vpop.permute.xlu0 %1776
    %1778 = vrot.lane.b32.xlu0 %v1755, 96
    %v1779 = vpop.permute.xlu0 %1778
    %v1788 = vadd.f32 %v1740, %v1765
    %v1789 = vadd.f32 %v1741, %v1767
    %v1790 = vadd.f32 %v1742, %v1769
    %v1791 = vadd.f32 %v1743, %v1771
    %v1792 = vadd.f32 %v1744, %v1773
    %v1793 = vadd.f32 %v1745, %v1775
    %v1794 = vadd.f32 %v1746, %v1777
    %v1795 = vadd.f32 %v1747, %v1779
    %1796 = vst.msk [vmem:[#allocation11] sm:$0xff] %vm311, %v1788
    %1797 = vst.msk [vmem:[#allocation11 + $0x8] sm:$0xff] %vm311, %v1789
    %1798 = vst.msk [vmem:[#allocation11 + $0x10] sm:$0xff] %vm311, %v1790
    %1799 = vst.msk [vmem:[#allocation11 + $0x18] sm:$0xff] %vm311, %v1791
    %1800 = vst.msk [vmem:[#allocation11 + $0x20] sm:$0xff] %vm311, %v1792
    %1801 = vst.msk [vmem:[#allocation11 + $0x28] sm:$0xff] %vm311, %v1793
    %1802 = vst.msk [vmem:[#allocation11 + $0x30] sm:$0xff] %vm311, %v1794
    %1803 = vst.msk [vmem:[#allocation11 + $0x38] sm:$0xff] %vm311, %v1795
    %v1804 = vmul.f32 %v233, %v1702
    %v1805 = vmul.f32 %v237, %v1705
    %v1806 = vmul.f32 %v241, %v1710
    %v1807 = vmul.f32 %v245, %v1713
    %v1808 = vmul.f32 %v249, %v1718
    %v1809 = vmul.f32 %v253, %v1721
    %v1810 = vmul.f32 %v257, %v1726
    %v1811 = vmul.f32 %v261, %v1729
    %v1812 = vadd.f32 %v1804, 0.0
    %v1813 = vadd.f32 %v1805, 0.0
    %v1814 = vadd.f32 %v1806, 0.0
    %v1815 = vadd.f32 %v1807, 0.0
    %v1816 = vadd.f32 %v1808, 0.0
    %v1817 = vadd.f32 %v1809, 0.0
    %v1818 = vadd.f32 %v1810, 0.0
    %v1819 = vadd.f32 %v1811, 0.0
    %v1820 = vmul.f32 %v370, %v1702
    %v1821 = vmul.f32 %v374, %v1705
    %v1822 = vmul.f32 %v378, %v1710
    %v1823 = vmul.f32 %v382, %v1713
    %v1824 = vmul.f32 %v386, %v1718
    %v1825 = vmul.f32 %v390, %v1721
    %v1826 = vmul.f32 %v394, %v1726
    %v1827 = vmul.f32 %v398, %v1729
    %1836 = vrot.lane.b32.xlu0 %v1820, 96
    %v1837 = vpop.permute.xlu0 %1836
    %1838 = vrot.lane.b32.xlu0 %v1821, 96
    %v1839 = vpop.permute.xlu0 %1838
    %1840 = vrot.lane.b32.xlu0 %v1822, 96
    %v1841 = vpop.permute.xlu0 %1840
    %1842 = vrot.lane.b32.xlu0 %v1823, 96
    %v1843 = vpop.permute.xlu0 %1842
    %1844 = vrot.lane.b32.xlu0 %v1824, 96
    %v1845 = vpop.permute.xlu0 %1844
    %1846 = vrot.lane.b32.xlu0 %v1825, 96
    %v1847 = vpop.permute.xlu0 %1846
    %1848 = vrot.lane.b32.xlu0 %v1826, 96
    %v1849 = vpop.permute.xlu0 %1848
    %1850 = vrot.lane.b32.xlu0 %v1827, 96
    %v1851 = vpop.permute.xlu0 %1850
    %v1860 = vadd.f32 %v1812, %v1837
    %v1861 = vadd.f32 %v1813, %v1839
    %v1862 = vadd.f32 %v1814, %v1841
    %v1863 = vadd.f32 %v1815, %v1843
    %v1864 = vadd.f32 %v1816, %v1845
    %v1865 = vadd.f32 %v1817, %v1847
    %v1866 = vadd.f32 %v1818, %v1849
    %v1867 = vadd.f32 %v1819, %v1851
    %1876 = vrot.lane.b32.xlu0 %v1860, 32
    %v1877 = vpop.permute.xlu0 %1876
    %1878 = vrot.lane.b32.xlu0 %v1861, 32
    %v1879 = vpop.permute.xlu0 %1878
    %1880 = vrot.lane.b32.xlu0 %v1862, 32
    %v1881 = vpop.permute.xlu0 %1880
    %1882 = vrot.lane.b32.xlu0 %v1863, 32
    %v1883 = vpop.permute.xlu0 %1882
    %1884 = vrot.lane.b32.xlu0 %v1864, 32
    %v1885 = vpop.permute.xlu0 %1884
    %1886 = vrot.lane.b32.xlu0 %v1865, 32
    %v1887 = vpop.permute.xlu0 %1886
    %1888 = vrot.lane.b32.xlu0 %v1866, 32
    %v1889 = vpop.permute.xlu0 %1888
    %1890 = vrot.lane.b32.xlu0 %v1867, 32
    %v1891 = vpop.permute.xlu0 %1890
    %1900 = vst.msk [vmem:[#allocation11] sm:$0xff] %vm480, %v1877
    %1901 = vst.msk [vmem:[#allocation11 + $0x8] sm:$0xff] %vm480, %v1879
    %1902 = vst.msk [vmem:[#allocation11 + $0x10] sm:$0xff] %vm480, %v1881
    %1903 = vst.msk [vmem:[#allocation11 + $0x18] sm:$0xff] %vm480, %v1883
    %1904 = vst.msk [vmem:[#allocation11 + $0x20] sm:$0xff] %vm480, %v1885
    %1905 = vst.msk [vmem:[#allocation11 + $0x28] sm:$0xff] %vm480, %v1887
    %1906 = vst.msk [vmem:[#allocation11 + $0x30] sm:$0xff] %vm480, %v1889
    %1907 = vst.msk [vmem:[#allocation11 + $0x38] sm:$0xff] %vm480, %v1891
    %v1908 = vmul.f32 %v491, %v1702
    %v1909 = vmul.f32 %v495, %v1705
    %v1910 = vmul.f32 %v499, %v1710
    %v1911 = vmul.f32 %v503, %v1713
    %v1912 = vmul.f32 %v507, %v1718
    %v1913 = vmul.f32 %v511, %v1721
    %v1914 = vmul.f32 %v515, %v1726
    %v1915 = vmul.f32 %v519, %v1729
    %v1916 = vadd.f32 %v1908, 0.0
    %v1917 = vadd.f32 %v1909, 0.0
    %v1918 = vadd.f32 %v1910, 0.0
    %v1919 = vadd.f32 %v1911, 0.0
    %v1920 = vadd.f32 %v1912, 0.0
    %v1921 = vadd.f32 %v1913, 0.0
    %v1922 = vadd.f32 %v1914, 0.0
    %v1923 = vadd.f32 %v1915, 0.0
    %v1924 = vmul.f32 %v628, %v1702
    %v1925 = vmul.f32 %v632, %v1705
    %v1926 = vmul.f32 %v636, %v1710
    %v1927 = vmul.f32 %v640, %v1713
    %v1928 = vmul.f32 %v644, %v1718
    %v1929 = vmul.f32 %v648, %v1721
    %v1930 = vmul.f32 %v652, %v1726
    %v1931 = vmul.f32 %v656, %v1729
    %1940 = vrot.lane.b32.xlu0 %v1924, 96
    %v1941 = vpop.permute.xlu0 %1940
    %1942 = vrot.lane.b32.xlu0 %v1925, 96
    %v1943 = vpop.permute.xlu0 %1942
    %1944 = vrot.lane.b32.xlu0 %v1926, 96
    %v1945 = vpop.permute.xlu0 %1944
    %1946 = vrot.lane.b32.xlu0 %v1927, 96
    %v1947 = vpop.permute.xlu0 %1946
    %1948 = vrot.lane.b32.xlu0 %v1928, 96
    %v1949 = vpop.permute.xlu0 %1948
    %1950 = vrot.lane.b32.xlu0 %v1929, 96
    %v1951 = vpop.permute.xlu0 %1950
    %1952 = vrot.lane.b32.xlu0 %v1930, 96
    %v1953 = vpop.permute.xlu0 %1952
    %1954 = vrot.lane.b32.xlu0 %v1931, 96
    %v1955 = vpop.permute.xlu0 %1954
    %v1964 = vadd.f32 %v1916, %v1941
    %v1965 = vadd.f32 %v1917, %v1943
    %v1966 = vadd.f32 %v1918, %v1945
    %v1967 = vadd.f32 %v1919, %v1947
    %v1968 = vadd.f32 %v1920, %v1949
    %v1969 = vadd.f32 %v1921, %v1951
    %v1970 = vadd.f32 %v1922, %v1953
    %v1971 = vadd.f32 %v1923, %v1955
    %1972 = vst.msk [vmem:[#allocation11] sm:$0xff] %vm617, %v1964
    %1973 = vst.msk [vmem:[#allocation11 + $0x8] sm:$0xff] %vm617, %v1965
    %1974 = vst.msk [vmem:[#allocation11 + $0x10] sm:$0xff] %vm617, %v1966
    %1975 = vst.msk [vmem:[#allocation11 + $0x18] sm:$0xff] %vm617, %v1967
    %1976 = vst.msk [vmem:[#allocation11 + $0x20] sm:$0xff] %vm617, %v1968
    %1977 = vst.msk [vmem:[#allocation11 + $0x28] sm:$0xff] %vm617, %v1969
    %1978 = vst.msk [vmem:[#allocation11 + $0x30] sm:$0xff] %vm617, %v1970
    %1979 = vst.msk [vmem:[#allocation11 + $0x38] sm:$0xff] %vm617, %v1971
    %v1980 = vmul.f32 %v539, %v1702
    %v1981 = vmul.f32 %v543, %v1705
    %v1982 = vmul.f32 %v547, %v1710
    %v1983 = vmul.f32 %v551, %v1713
    %v1984 = vmul.f32 %v555, %v1718
    %v1985 = vmul.f32 %v559, %v1721
    %v1986 = vmul.f32 %v563, %v1726
    %v1987 = vmul.f32 %v567, %v1729
    %v1988 = vadd.f32 %v1980, 0.0
    %v1989 = vadd.f32 %v1981, 0.0
    %v1990 = vadd.f32 %v1982, 0.0
    %v1991 = vadd.f32 %v1983, 0.0
    %v1992 = vadd.f32 %v1984, 0.0
    %v1993 = vadd.f32 %v1985, 0.0
    %v1994 = vadd.f32 %v1986, 0.0
    %v1995 = vadd.f32 %v1987, 0.0
    %v1996 = vmul.f32 %v676, %v1702
    %v1997 = vmul.f32 %v680, %v1705
    %v1998 = vmul.f32 %v684, %v1710
    %v1999 = vmul.f32 %v688, %v1713
    %v2000 = vmul.f32 %v692, %v1718
    %v2001 = vmul.f32 %v696, %v1721
    %v2002 = vmul.f32 %v700, %v1726
    %v2003 = vmul.f32 %v704, %v1729
    %2012 = vrot.lane.b32.xlu0 %v1996, 96
    %v2013 = vpop.permute.xlu0 %2012
    %2014 = vrot.lane.b32.xlu0 %v1997, 96
    %v2015 = vpop.permute.xlu0 %2014
    %2016 = vrot.lane.b32.xlu0 %v1998, 96
    %v2017 = vpop.permute.xlu0 %2016
    %2018 = vrot.lane.b32.xlu0 %v1999, 96
    %v2019 = vpop.permute.xlu0 %2018
    %2020 = vrot.lane.b32.xlu0 %v2000, 96
    %v2021 = vpop.permute.xlu0 %2020
    %2022 = vrot.lane.b32.xlu0 %v2001, 96
    %v2023 = vpop.permute.xlu0 %2022
    %2024 = vrot.lane.b32.xlu0 %v2002, 96
    %v2025 = vpop.permute.xlu0 %2024
    %2026 = vrot.lane.b32.xlu0 %v2003, 96
    %v2027 = vpop.permute.xlu0 %2026
    %v2036 = vadd.f32 %v1988, %v2013
    %v2037 = vadd.f32 %v1989, %v2015
    %v2038 = vadd.f32 %v1990, %v2017
    %v2039 = vadd.f32 %v1991, %v2019
    %v2040 = vadd.f32 %v1992, %v2021
    %v2041 = vadd.f32 %v1993, %v2023
    %v2042 = vadd.f32 %v1994, %v2025
    %v2043 = vadd.f32 %v1995, %v2027
    %2052 = vrot.lane.b32.xlu0 %v2036, 32
    %v2053 = vpop.permute.xlu0 %2052
    %2054 = vrot.lane.b32.xlu0 %v2037, 32
    %v2055 = vpop.permute.xlu0 %2054
    %2056 = vrot.lane.b32.xlu0 %v2038, 32
    %v2057 = vpop.permute.xlu0 %2056
    %2058 = vrot.lane.b32.xlu0 %v2039, 32
    %v2059 = vpop.permute.xlu0 %2058
    %2060 = vrot.lane.b32.xlu0 %v2040, 32
    %v2061 = vpop.permute.xlu0 %2060
    %2062 = vrot.lane.b32.xlu0 %v2041, 32
    %v2063 = vpop.permute.xlu0 %2062
    %2064 = vrot.lane.b32.xlu0 %v2042, 32
    %v2065 = vpop.permute.xlu0 %2064
    %2066 = vrot.lane.b32.xlu0 %v2043, 32
    %v2067 = vpop.permute.xlu0 %2066
    %2076 = vst.msk [vmem:[#allocation11] sm:$0xff] %vm786, %v2053
    %2077 = vst.msk [vmem:[#allocation11 + $0x8] sm:$0xff] %vm786, %v2055
    %2078 = vst.msk [vmem:[#allocation11 + $0x10] sm:$0xff] %vm786, %v2057
    %2079 = vst.msk [vmem:[#allocation11 + $0x18] sm:$0xff] %vm786, %v2059
    %2080 = vst.msk [vmem:[#allocation11 + $0x20] sm:$0xff] %vm786, %v2061
    %2081 = vst.msk [vmem:[#allocation11 + $0x28] sm:$0xff] %vm786, %v2063
    %2082 = vst.msk [vmem:[#allocation11 + $0x30] sm:$0xff] %vm786, %v2065
    %2083 = vst.msk [vmem:[#allocation11 + $0x38] sm:$0xff] %vm786, %v2067
    // Predicated region
    $region50: #{tpu_custom_call.1} parent=1 // pred_check
      _
    $region51: #{tpu_custom_call.1} parent=1 // pred_check_branch
      %2085 = sbr.rel (0) target = $region53
    $region52: #{tpu_custom_call.1} parent=1 // pred_region
      %s2087 = ssub.s32 1024, 1024
      %2088 = vsyncadd [#allocation5], %s2087
      %s2089 = sshll.u32 [#allocation11], 4
      %s2090 = int_to_ptr.vmem [resolvable:$true] %s2089
      %2095 = dma.vmem_to_hbm [thread:$0]  %s2090, 1024, %s8, [#allocation5], 128, 128, 8
    $region53: #{tpu_custom_call.1} parent=1 // pred_fallthru
      _
    // Predicated region
    $region54: #{tpu_custom_call.1} parent=1 // pred_check
      _
    $region55: #{tpu_custom_call.1} parent=1 // pred_check_branch
      %2097 = sbr.rel (0) target = $region57
    $region56: #{tpu_custom_call.1} parent=1 // pred_region
      %2098 = dma.done [#allocation5], 1024
    $region57: #{tpu_custom_call.1} parent=1 // pred_fallthru
      _
    %2099 = vsyncpa [#allocation4], 1
    %2100 = vsyncpa [#allocation7], 1
    %2101 = vsyncpa [#allocation10], 1
    %2102 = vsyncpa [#allocation5], 1

</llo_original>
